<compile_context>
chip_gen: v5e
topology: v5e:2x2
jax: 0.10.0
libtpu: 0.0.40
codegen_flags: <defaults>
</compile_context>

<pallas_src>
import functools
import math

import jax
import jax.numpy as jnp
import numpy as np
from jax.experimental import pallas as pl
from jax.experimental.pallas import tpu as pltpu


def _layernorm(v, eps):
    mu = jnp.mean(v, axis=-1, keepdims=True)
    var = jnp.mean((v - mu) ** 2, axis=-1, keepdims=True)
    return (v - mu) * jax.lax.rsqrt(var + eps)


def _gelu_tanh(v):
    # GELU(approximate='tanh')
    return 0.5 * v * (1.0 + jnp.tanh(0.7978845608028654 * (v + 0.044715 * v * v * v)))


def dit_block_kernel(x_ref, mod_ref,
                     wqkv_ref, bqkv_ref,
                     wproj_ref, bproj_ref,
                     wfc1_ref, bfc1_ref,
                     wfc2_ref, bfc2_ref,
                     out_ref,
                     *, num_heads, eps):
    f32 = jnp.float32
    bf16 = jnp.bfloat16

    x = x_ref[0].astype(f32)          # (N, D) residual stream, f32
    mod = mod_ref[0]                  # (6, D) precomputed adaLN chunks, f32

    # Sublane slices of a tiny (6, D) tile — cheap, no lane crossing.
    shift_attn = mod[0:1]             # (1, D)
    scale_attn = 1.0 + mod[1:2]       # hoisted (1 + scale)
    gate_attn = mod[2:3]
    shift_pff = mod[3:4]
    scale_pff = 1.0 + mod[4:5]
    gate_pff = mod[5:6]

    # ---- attention branch ----------------------------------------------------
    h = (_layernorm(x, eps) * scale_attn + shift_attn).astype(bf16)   # (N, D)

    # Heads come straight off weight-side-split matmuls (w_qkv host-reshaped to
    # (3, H, D, Dh)): each head is a plain 2D MXU dot with f32 accumulation and
    # the stack is a leading-axis concat — no activation-side lane relayouts.
    # The 1/sqrt(Dh) attention scale is pre-folded into the q weights/bias.
    def project_heads(i):
        tiles = [jnp.dot(h, wqkv_ref[i, hh], preferred_element_type=f32)
                 for hh in range(num_heads)]
        return (jnp.stack(tiles, axis=0) + bqkv_ref[i]).astype(bf16)  # (H, N, Dh)

    qh = project_heads(0)
    kh = project_heads(1)
    vh = project_heads(2)

    # Head-batched attention core: one MXU stream per einsum, f32 softmax.
    s = jnp.einsum("hqd,hkd->hqk", qh, kh,
                   preferred_element_type=f32)                        # (H, N, N)
    s = s - jnp.max(s, axis=-1, keepdims=True)
    p = jnp.exp(s)
    p = p * pl.reciprocal(jnp.sum(p, axis=-1, keepdims=True), approx=True)
    o = jnp.einsum("hqk,hkd->hqd", p.astype(bf16), vh,
                   preferred_element_type=f32)                        # (H, N, Dh)

    # Output projection with the head merge folded into the contraction:
    # per-head (N,Dh)@(Dh,D) partials accumulate into a single (N, D) f32
    # buffer — never materializes an (H, N, D) f32 intermediate.
    attn_out = jnp.dot(o[0].astype(bf16), wproj_ref[0],
                       preferred_element_type=f32)
    for hh in range(1, num_heads):
        attn_out = attn_out + jnp.dot(o[hh].astype(bf16), wproj_ref[hh],
                                      preferred_element_type=f32)
    attn_out = attn_out + bproj_ref[...]                              # (N, D)

    x = x + gate_attn * attn_out       # fused gate * branch + residual

    # ---- pointwise feed-forward branch ----------------------------------------
    h2 = (_layernorm(x, eps) * scale_pff + shift_pff).astype(bf16)
    f = jnp.dot(h2, wfc1_ref[...], preferred_element_type=f32) + bfc1_ref[...]
    f = _gelu_tanh(f).astype(bf16)
    f = jnp.dot(f, wfc2_ref[...], preferred_element_type=f32) + bfc2_ref[...]

    x = x + gate_pff * f
    out_ref[0] = x.astype(out_ref.dtype)


def _vmem_limit_bytes():
    """Generation-aware VMEM limit: ~3/4 of physical capacity (~48 MiB on v7x,
    ~96 MiB on v5e/v6e).  Falls back to the compiler default (None) if the
    hardware query is unavailable; the fallback never changes the kernel's
    memory footprint, only the scoped-VMEM cap."""
    try:
        cap = pltpu.get_tpu_info().vmem_capacity_bytes
    except Exception:
        return None
    return (int(cap) * 3) // 4


def dit_block(x, c, params, *, num_heads, eps=1e-6):
    B, N, D = x.shape
    Hm = params["w_fc1"].shape[1]
    Dh = D // num_heads
    bf16 = jnp.bfloat16
    f32 = jnp.float32

    # ---- host/XLA-side prep ---------------------------------------------------
    # adaLN modulation is a tiny (B,D)@(D,6D) matmul: computing it in plain XLA
    # keeps w_mod (the largest weight) out of kernel VMEM residency and avoids
    # six M=1 matmuls that run the MXU fill/drain-bound.  Kept in f32 so it
    # matches the PyTorch reference exactly.
    c_f32 = c.astype(f32)
    c_act = c_f32 * jax.nn.sigmoid(c_f32)
    mod = (c_act @ params["w_mod"].astype(f32)
           + params["b_mod"].astype(f32)).reshape(B, 6, D)

    # q/k/v weights split per chunk and per head on leading axes (free to index
    # in-kernel); 1/sqrt(Dh) attention scale folded into the q chunk.
    attn_scale = 1.0 / math.sqrt(Dh)
    qkv_scale = jnp.array([attn_scale, 1.0, 1.0], f32).reshape(3, 1, 1, 1)
    w_qkv = params["w_qkv"].reshape(D, 3, num_heads, Dh).transpose(1, 2, 0, 3)
    w_qkv = (w_qkv * qkv_scale).astype(bf16)                  # (3, H, D, Dh)
    b_qkv = params["b_qkv"].reshape(3, num_heads, 1, Dh)
    b_qkv = (b_qkv * qkv_scale).astype(f32)                   # (3, H, 1, Dh)

    # Output-projection weight head-major so the head merge folds into the
    # projection contraction (accumulated in f32 inside the kernel).
    w_proj = params["w_proj"].reshape(num_heads, Dh, D).astype(bf16)
    b_proj = params["b_proj"].reshape(1, D).astype(f32)

    w_fc1 = params["w_fc1"].astype(bf16)
    b_fc1 = params["b_fc1"].reshape(1, Hm).astype(f32)
    w_fc2 = params["w_fc2"].astype(bf16)
    b_fc2 = params["b_fc2"].reshape(1, D).astype(f32)

    kernel = functools.partial(dit_block_kernel, num_heads=num_heads, eps=eps)

    def const_spec(shape):
        # Grid-invariant operands: constant index_map -> fetched once and
        # revisited on every grid step (no per-step re-DMA).
        # TODO(synk): at production sizes, K-tile the MLP weights across a
        # grid axis (or DMA them from pl.ANY at step 0) instead of holding
        # them whole in VMEM.
        return pl.BlockSpec(shape, lambda b: (0,) * len(shape))

    return pl.pallas_call(
        kernel,
        out_shape=jax.ShapeDtypeStruct((B, N, D), x.dtype),
        grid=(B,),
        in_specs=[
            pl.BlockSpec((1, N, D), lambda b: (b, 0, 0)),       # x
            pl.BlockSpec((1, 6, D), lambda b: (b, 0, 0)),       # adaLN chunks
            const_spec((3, num_heads, D, Dh)),                  # w_qkv (chunk/head-major)
            const_spec((3, num_heads, 1, Dh)),                  # b_qkv
            const_spec((num_heads, Dh, D)),                     # w_proj (head-major)
            const_spec((1, D)),                                 # b_proj
            const_spec((D, Hm)),                                # w_fc1
            const_spec((1, Hm)),                                # b_fc1
            const_spec((Hm, D)),                                # w_fc2
            const_spec((1, D)),                                 # b_fc2
        ],
        out_specs=pl.BlockSpec((1, N, D), lambda b: (b, 0, 0)),
        compiler_params=pltpu.CompilerParams(
            dimension_semantics=("parallel",),
            vmem_limit_bytes=_vmem_limit_bytes()),
    )(x, mod, w_qkv, b_qkv, w_proj, b_proj, w_fc1, b_fc1, w_fc2, b_fc2)


# ---------------- pure-JAX reference (for correctness check) -----------------
def dit_block_ref(x, c, params, *, num_heads, eps=1e-6):
    B, N, D = x.shape
    head_dim = D // num_heads

    def ln(v):
        mu = jnp.mean(v, axis=-1, keepdims=True)
        var = jnp.mean((v - mu) ** 2, axis=-1, keepdims=True)
        return (v - mu) / jnp.sqrt(var + eps)

    c_act = c * jax.nn.sigmoid(c)
    mod = c_act @ params["w_mod"] + params["b_mod"]
    (shift_attn, scale_attn, gate_attn,
     shift_pff, scale_pff, gate_pff) = jnp.split(mod, 6, axis=-1)

    def ss(v, shift, scale):
        return v * (1 + scale[:, None, :]) + shift[:, None, :]

    h = ss(ln(x), shift_attn, scale_attn)
    qkv = h @ params["w_qkv"] + params["b_qkv"]
    q, k, v = jnp.split(qkv, 3, axis=-1)
    q = q.reshape(B, N, num_heads, head_dim).transpose(0, 2, 1, 3)
    k = k.reshape(B, N, num_heads, head_dim).transpose(0, 2, 1, 3)
    v = v.reshape(B, N, num_heads, head_dim).transpose(0, 2, 1, 3)
    s = jnp.einsum("bhnd,bhmd->bhnm", q, k) / math.sqrt(head_dim)
    p = jax.nn.softmax(s, axis=-1)
    o = jnp.einsum("bhnm,bhmd->bhnd", p, v).transpose(0, 2, 1, 3).reshape(B, N, D)
    o = o @ params["w_proj"] + params["b_proj"]
    x = x + gate_attn[:, None, :] * o

    h2 = ss(ln(x), shift_pff, scale_pff)
    f = h2 @ params["w_fc1"] + params["b_fc1"]
    f = 0.5 * f * (1.0 + jnp.tanh(0.7978845608028654 * (f + 0.044715 * f ** 3)))
    f = f @ params["w_fc2"] + params["b_fc2"]
    x = x + gate_pff[:, None, :] * f
    return x


if __name__ == "__main__":
    B, N, D = 2, 8, 32
    num_heads = 4
    mlp_ratio = 4.0
    Hm = int(D * mlp_ratio)

    key = jax.random.PRNGKey(0)
    keys = jax.random.split(key, 12)

    def init(k, shape, scale=0.02):
        return scale * jax.random.normal(k, shape, dtype=jnp.float32)

    params = {
        "w_mod":  init(keys[0], (D, 6 * D)),
        "b_mod":  init(keys[1], (6 * D,)),
        "w_qkv":  init(keys[2], (D, 3 * D)),
        "b_qkv":  init(keys[3], (3 * D,)),
        "w_proj": init(keys[4], (D, D)),
        "b_proj": init(keys[5], (D,)),
        "w_fc1":  init(keys[6], (D, Hm)),
        "b_fc1":  init(keys[7], (Hm,)),
        "w_fc2":  init(keys[8], (Hm, D)),
        "b_fc2":  init(keys[9], (D,)),
    }

    x = jax.random.normal(keys[10], (B, N, D), dtype=jnp.float32)
    c = jax.random.normal(keys[11], (B, D), dtype=jnp.float32)

    out = dit_block(x, c, params, num_heads=num_heads)
    out = jax.block_until_ready(out)

    ref = dit_block_ref(x, c, params, num_heads=num_heads)
    # Tolerance accounts for bf16 matmul inputs (f32 accumulation) and the
    # approximate (EUP) softmax reciprocal; estimated error is well under 1e-3.
    np.testing.assert_allclose(np.asarray(out), np.asarray(ref),
                               rtol=5e-3, atol=5e-3)

    print("KERNEL_OK")
</pallas_src>

<mosaic_0001>
module attributes {stable_mosaic.version = 11 : i64} {
  func.func @dit_block_kernel(%arg0: i32, %arg1: memref<1x8x32xf32, #tpu.memory_space<vmem>>, %arg2: memref<1x6x32xf32, #tpu.memory_space<vmem>>, %arg3: memref<3x4x32x8xbf16, #tpu.memory_space<vmem>>, %arg4: memref<3x4x1x8xf32, #tpu.memory_space<vmem>>, %arg5: memref<4x8x32xbf16, #tpu.memory_space<vmem>>, %arg6: memref<1x32xf32, #tpu.memory_space<vmem>>, %arg7: memref<32x128xbf16, #tpu.memory_space<vmem>>, %arg8: memref<1x128xf32, #tpu.memory_space<vmem>>, %arg9: memref<128x32xbf16, #tpu.memory_space<vmem>>, %arg10: memref<1x32xf32, #tpu.memory_space<vmem>>, %arg11: memref<1x8x32xf32, #tpu.memory_space<vmem>>) attributes {dimension_semantics = [#tpu.dimension_semantics<parallel>], iteration_bounds = array<i64: 2>, scalar_prefetch = 0 : i64, scratch_operands = 0 : i64, tpu.core_type = #tpu.core_type<tc>, window_params = [{transform_indices = @transform_0, window_bounds = array<i64: 1, 8, 32>}, {transform_indices = @transform_1, window_bounds = array<i64: 1, 6, 32>}, {pipeline_mode = #tpu.pipeline_mode<synchronous>, transform_indices = @transform_2, window_bounds = array<i64: 3, 4, 32, 8>}, {pipeline_mode = #tpu.pipeline_mode<synchronous>, transform_indices = @transform_3, window_bounds = array<i64: 3, 4, 1, 8>}, {pipeline_mode = #tpu.pipeline_mode<synchronous>, transform_indices = @transform_4, window_bounds = array<i64: 4, 8, 32>}, {pipeline_mode = #tpu.pipeline_mode<synchronous>, transform_indices = @transform_5, window_bounds = array<i64: 1, 32>}, {pipeline_mode = #tpu.pipeline_mode<synchronous>, transform_indices = @transform_6, window_bounds = array<i64: 32, 128>}, {pipeline_mode = #tpu.pipeline_mode<synchronous>, transform_indices = @transform_7, window_bounds = array<i64: 1, 128>}, {pipeline_mode = #tpu.pipeline_mode<synchronous>, transform_indices = @transform_8, window_bounds = array<i64: 128, 32>}, {pipeline_mode = #tpu.pipeline_mode<synchronous>, transform_indices = @transform_9, window_bounds = array<i64: 1, 32>}, {transform_indices = @transform_10, window_bounds = array<i64: 1, 8, 32>}]} {
    %c0 = arith.constant 0 : index
    %c0_0 = arith.constant 0 : index
    %c0_1 = arith.constant 0 : index
    %0 = vector.load %arg1[%c0, %c0_0, %c0_1] : memref<1x8x32xf32, #tpu.memory_space<vmem>>, vector<1x8x32xf32>
    %1 = vector.shape_cast %0 : vector<1x8x32xf32> to vector<8x32xf32>
    %c0_2 = arith.constant 0 : index
    %c0_3 = arith.constant 0 : index
    %c0_4 = arith.constant 0 : index
    %2 = vector.load %arg2[%c0_2, %c0_3, %c0_4] : memref<1x6x32xf32, #tpu.memory_space<vmem>>, vector<1x6x32xf32>
    %3 = vector.shape_cast %2 : vector<1x6x32xf32> to vector<6x32xf32>
    %4 = vector.extract_strided_slice %3 {offsets = [0, 0], sizes = [1, 32], strides = [1, 1]} : vector<6x32xf32> to vector<1x32xf32>
    %5 = vector.extract_strided_slice %3 {offsets = [1, 0], sizes = [1, 32], strides = [1, 1]} : vector<6x32xf32> to vector<1x32xf32>
    %cst = arith.constant 1.000000e+00 : f32
    %6 = vector.broadcast %cst : f32 to vector<1x32xf32>
    %7 = arith.addf %6, %5 : vector<1x32xf32>
    %8 = vector.extract_strided_slice %3 {offsets = [2, 0], sizes = [1, 32], strides = [1, 1]} : vector<6x32xf32> to vector<1x32xf32>
    %9 = vector.extract_strided_slice %3 {offsets = [3, 0], sizes = [1, 32], strides = [1, 1]} : vector<6x32xf32> to vector<1x32xf32>
    %10 = vector.extract_strided_slice %3 {offsets = [4, 0], sizes = [1, 32], strides = [1, 1]} : vector<6x32xf32> to vector<1x32xf32>
    %cst_5 = arith.constant 1.000000e+00 : f32
    %11 = vector.broadcast %cst_5 : f32 to vector<1x32xf32>
    %12 = arith.addf %11, %10 : vector<1x32xf32>
    %13 = vector.extract_strided_slice %3 {offsets = [5, 0], sizes = [1, 32], strides = [1, 1]} : vector<6x32xf32> to vector<1x32xf32>
    %cst_6 = arith.constant dense<0.000000e+00> : vector<8xf32>
    %14 = vector.multi_reduction <add>, %1, %cst_6 [1] : vector<8x32xf32> to vector<8xf32>
    %15 = vector.shape_cast %14 : vector<8xf32> to vector<8x1xf32>
    %cst_7 = arith.constant 3.200000e+01 : f32
    %16 = vector.broadcast %cst_7 : f32 to vector<8x1xf32>
    %17 = arith.divf %15, %16 : vector<8x1xf32>
    %18 = vector.broadcast %17 : vector<8x1xf32> to vector<8x32xf32>
    %19 = arith.subf %1, %18 : vector<8x32xf32>
    %20 = arith.mulf %19, %19 : vector<8x32xf32>
    %cst_8 = arith.constant dense<0.000000e+00> : vector<8xf32>
    %21 = vector.multi_reduction <add>, %20, %cst_8 [1] : vector<8x32xf32> to vector<8xf32>
    %22 = vector.shape_cast %21 : vector<8xf32> to vector<8x1xf32>
    %cst_9 = arith.constant 3.200000e+01 : f32
    %23 = vector.broadcast %cst_9 : f32 to vector<8x1xf32>
    %24 = arith.divf %22, %23 : vector<8x1xf32>
    %25 = vector.broadcast %17 : vector<8x1xf32> to vector<8x32xf32>
    %26 = arith.subf %1, %25 : vector<8x32xf32>
    %cst_10 = arith.constant 9.99999997E-7 : f32
    %27 = vector.broadcast %cst_10 : f32 to vector<8x1xf32>
    %28 = arith.addf %24, %27 : vector<8x1xf32>
    %29 = math.rsqrt %28 : vector<8x1xf32>
    %30 = vector.broadcast %29 : vector<8x1xf32> to vector<8x32xf32>
    %31 = arith.mulf %26, %30 : vector<8x32xf32>
    %32 = vector.broadcast %7 : vector<1x32xf32> to vector<8x32xf32>
    %33 = arith.mulf %31, %32 : vector<8x32xf32>
    %34 = vector.broadcast %4 : vector<1x32xf32> to vector<8x32xf32>
    %35 = arith.addf %33, %34 : vector<8x32xf32>
    %36 = arith.truncf %35 : vector<8x32xf32> to vector<8x32xbf16>
    %c0_11 = arith.constant 0 : index
    %c0_12 = arith.constant 0 : index
    %c0_13 = arith.constant 0 : index
    %c0_14 = arith.constant 0 : index
    %37 = vector.load %arg3[%c0_11, %c0_12, %c0_13, %c0_14] : memref<3x4x32x8xbf16, #tpu.memory_space<vmem>>, vector<1x1x32x8xbf16>
    %38 = vector.shape_cast %37 : vector<1x1x32x8xbf16> to vector<32x8xbf16>
    %cst_15 = arith.constant dense<0.000000e+00> : vector<8x8xf32>
    %39 = tpu.matmul %36, %38, %cst_15 {dimension_numbers = #tpu.dot_dimension_numbers<[1], [0], [0], [1], [0, 0, 1, 1], [], []>} : vector<8x32xbf16>, vector<32x8xbf16>, vector<8x8xf32> -> vector<8x8xf32>
    %c0_16 = arith.constant 0 : index
    %c1 = arith.constant 1 : index
    %c0_17 = arith.constant 0 : index
    %c0_18 = arith.constant 0 : index
    %40 = vector.load %arg3[%c0_16, %c1, %c0_17, %c0_18] : memref<3x4x32x8xbf16, #tpu.memory_space<vmem>>, vector<1x1x32x8xbf16>
    %41 = vector.shape_cast %40 : vector<1x1x32x8xbf16> to vector<32x8xbf16>
    %cst_19 = arith.constant dense<0.000000e+00> : vector<8x8xf32>
    %42 = tpu.matmul %36, %41, %cst_19 {dimension_numbers = #tpu.dot_dimension_numbers<[1], [0], [0], [1], [0, 0, 1, 1], [], []>} : vector<8x32xbf16>, vector<32x8xbf16>, vector<8x8xf32> -> vector<8x8xf32>
    %c0_20 = arith.constant 0 : index
    %c2 = arith.constant 2 : index
    %c0_21 = arith.constant 0 : index
    %c0_22 = arith.constant 0 : index
    %43 = vector.load %arg3[%c0_20, %c2, %c0_21, %c0_22] : memref<3x4x32x8xbf16, #tpu.memory_space<vmem>>, vector<1x1x32x8xbf16>
    %44 = vector.shape_cast %43 : vector<1x1x32x8xbf16> to vector<32x8xbf16>
    %cst_23 = arith.constant dense<0.000000e+00> : vector<8x8xf32>
    %45 = tpu.matmul %36, %44, %cst_23 {dimension_numbers = #tpu.dot_dimension_numbers<[1], [0], [0], [1], [0, 0, 1, 1], [], []>} : vector<8x32xbf16>, vector<32x8xbf16>, vector<8x8xf32> -> vector<8x8xf32>
    %c0_24 = arith.constant 0 : index
    %c3 = arith.constant 3 : index
    %c0_25 = arith.constant 0 : index
    %c0_26 = arith.constant 0 : index
    %46 = vector.load %arg3[%c0_24, %c3, %c0_25, %c0_26] : memref<3x4x32x8xbf16, #tpu.memory_space<vmem>>, vector<1x1x32x8xbf16>
    %47 = vector.shape_cast %46 : vector<1x1x32x8xbf16> to vector<32x8xbf16>
    %cst_27 = arith.constant dense<0.000000e+00> : vector<8x8xf32>
    %48 = tpu.matmul %36, %47, %cst_27 {dimension_numbers = #tpu.dot_dimension_numbers<[1], [0], [0], [1], [0, 0, 1, 1], [], []>} : vector<8x32xbf16>, vector<32x8xbf16>, vector<8x8xf32> -> vector<8x8xf32>
    %49 = vector.shape_cast %39 : vector<8x8xf32> to vector<1x8x8xf32>
    %50 = vector.shape_cast %42 : vector<8x8xf32> to vector<1x8x8xf32>
    %51 = vector.shape_cast %45 : vector<8x8xf32> to vector<1x8x8xf32>
    %52 = vector.shape_cast %48 : vector<8x8xf32> to vector<1x8x8xf32>
    %53 = tpu.concatenate %49, %50, %51, %52 in 0 : vector<1x8x8xf32>, vector<1x8x8xf32>, vector<1x8x8xf32>, vector<1x8x8xf32> -> vector<4x8x8xf32>
    %c0_28 = arith.constant 0 : index
    %c0_29 = arith.constant 0 : index
    %c0_30 = arith.constant 0 : index
    %c0_31 = arith.constant 0 : index
    %54 = vector.load %arg4[%c0_28, %c0_29, %c0_30, %c0_31] : memref<3x4x1x8xf32, #tpu.memory_space<vmem>>, vector<1x4x1x8xf32>
    %55 = vector.shape_cast %54 : vector<1x4x1x8xf32> to vector<4x1x8xf32>
    %56 = vector.broadcast %55 : vector<4x1x8xf32> to vector<4x8x8xf32>
    %57 = arith.addf %53, %56 : vector<4x8x8xf32>
    %58 = arith.truncf %57 : vector<4x8x8xf32> to vector<4x8x8xbf16>
    %c1_32 = arith.constant 1 : index
    %c0_33 = arith.constant 0 : index
    %c0_34 = arith.constant 0 : index
    %c0_35 = arith.constant 0 : index
    %59 = vector.load %arg3[%c1_32, %c0_33, %c0_34, %c0_35] : memref<3x4x32x8xbf16, #tpu.memory_space<vmem>>, vector<1x1x32x8xbf16>
    %60 = vector.shape_cast %59 : vector<1x1x32x8xbf16> to vector<32x8xbf16>
    %cst_36 = arith.constant dense<0.000000e+00> : vector<8x8xf32>
    %61 = tpu.matmul %36, %60, %cst_36 {dimension_numbers = #tpu.dot_dimension_numbers<[1], [0], [0], [1], [0, 0, 1, 1], [], []>} : vector<8x32xbf16>, vector<32x8xbf16>, vector<8x8xf32> -> vector<8x8xf32>
    %c1_37 = arith.constant 1 : index
    %c1_38 = arith.constant 1 : index
    %c0_39 = arith.constant 0 : index
    %c0_40 = arith.constant 0 : index
    %62 = vector.load %arg3[%c1_37, %c1_38, %c0_39, %c0_40] : memref<3x4x32x8xbf16, #tpu.memory_space<vmem>>, vector<1x1x32x8xbf16>
    %63 = vector.shape_cast %62 : vector<1x1x32x8xbf16> to vector<32x8xbf16>
    %cst_41 = arith.constant dense<0.000000e+00> : vector<8x8xf32>
    %64 = tpu.matmul %36, %63, %cst_41 {dimension_numbers = #tpu.dot_dimension_numbers<[1], [0], [0], [1], [0, 0, 1, 1], [], []>} : vector<8x32xbf16>, vector<32x8xbf16>, vector<8x8xf32> -> vector<8x8xf32>
    %c1_42 = arith.constant 1 : index
    %c2_43 = arith.constant 2 : index
    %c0_44 = arith.constant 0 : index
    %c0_45 = arith.constant 0 : index
    %65 = vector.load %arg3[%c1_42, %c2_43, %c0_44, %c0_45] : memref<3x4x32x8xbf16, #tpu.memory_space<vmem>>, vector<1x1x32x8xbf16>
    %66 = vector.shape_cast %65 : vector<1x1x32x8xbf16> to vector<32x8xbf16>
    %cst_46 = arith.constant dense<0.000000e+00> : vector<8x8xf32>
    %67 = tpu.matmul %36, %66, %cst_46 {dimension_numbers = #tpu.dot_dimension_numbers<[1], [0], [0], [1], [0, 0, 1, 1], [], []>} : vector<8x32xbf16>, vector<32x8xbf16>, vector<8x8xf32> -> vector<8x8xf32>
    %c1_47 = arith.constant 1 : index
    %c3_48 = arith.constant 3 : index
    %c0_49 = arith.constant 0 : index
    %c0_50 = arith.constant 0 : index
    %68 = vector.load %arg3[%c1_47, %c3_48, %c0_49, %c0_50] : memref<3x4x32x8xbf16, #tpu.memory_space<vmem>>, vector<1x1x32x8xbf16>
    %69 = vector.shape_cast %68 : vector<1x1x32x8xbf16> to vector<32x8xbf16>
    %cst_51 = arith.constant dense<0.000000e+00> : vector<8x8xf32>
    %70 = tpu.matmul %36, %69, %cst_51 {dimension_numbers = #tpu.dot_dimension_numbers<[1], [0], [0], [1], [0, 0, 1, 1], [], []>} : vector<8x32xbf16>, vector<32x8xbf16>, vector<8x8xf32> -> vector<8x8xf32>
    %71 = vector.shape_cast %61 : vector<8x8xf32> to vector<1x8x8xf32>
    %72 = vector.shape_cast %64 : vector<8x8xf32> to vector<1x8x8xf32>
    %73 = vector.shape_cast %67 : vector<8x8xf32> to vector<1x8x8xf32>
    %74 = vector.shape_cast %70 : vector<8x8xf32> to vector<1x8x8xf32>
    %75 = tpu.concatenate %71, %72, %73, %74 in 0 : vector<1x8x8xf32>, vector<1x8x8xf32>, vector<1x8x8xf32>, vector<1x8x8xf32> -> vector<4x8x8xf32>
    %c1_52 = arith.constant 1 : index
    %c0_53 = arith.constant 0 : index
    %c0_54 = arith.constant 0 : index
    %c0_55 = arith.constant 0 : index
    %76 = vector.load %arg4[%c1_52, %c0_53, %c0_54, %c0_55] : memref<3x4x1x8xf32, #tpu.memory_space<vmem>>, vector<1x4x1x8xf32>
    %77 = vector.shape_cast %76 : vector<1x4x1x8xf32> to vector<4x1x8xf32>
    %78 = vector.broadcast %77 : vector<4x1x8xf32> to vector<4x8x8xf32>
    %79 = arith.addf %75, %78 : vector<4x8x8xf32>
    %80 = arith.truncf %79 : vector<4x8x8xf32> to vector<4x8x8xbf16>
    %c2_56 = arith.constant 2 : index
    %c0_57 = arith.constant 0 : index
    %c0_58 = arith.constant 0 : index
    %c0_59 = arith.constant 0 : index
    %81 = vector.load %arg3[%c2_56, %c0_57, %c0_58, %c0_59] : memref<3x4x32x8xbf16, #tpu.memory_space<vmem>>, vector<1x1x32x8xbf16>
    %82 = vector.shape_cast %81 : vector<1x1x32x8xbf16> to vector<32x8xbf16>
    %cst_60 = arith.constant dense<0.000000e+00> : vector<8x8xf32>
    %83 = tpu.matmul %36, %82, %cst_60 {dimension_numbers = #tpu.dot_dimension_numbers<[1], [0], [0], [1], [0, 0, 1, 1], [], []>} : vector<8x32xbf16>, vector<32x8xbf16>, vector<8x8xf32> -> vector<8x8xf32>
    %c2_61 = arith.constant 2 : index
    %c1_62 = arith.constant 1 : index
    %c0_63 = arith.constant 0 : index
    %c0_64 = arith.constant 0 : index
    %84 = vector.load %arg3[%c2_61, %c1_62, %c0_63, %c0_64] : memref<3x4x32x8xbf16, #tpu.memory_space<vmem>>, vector<1x1x32x8xbf16>
    %85 = vector.shape_cast %84 : vector<1x1x32x8xbf16> to vector<32x8xbf16>
    %cst_65 = arith.constant dense<0.000000e+00> : vector<8x8xf32>
    %86 = tpu.matmul %36, %85, %cst_65 {dimension_numbers = #tpu.dot_dimension_numbers<[1], [0], [0], [1], [0, 0, 1, 1], [], []>} : vector<8x32xbf16>, vector<32x8xbf16>, vector<8x8xf32> -> vector<8x8xf32>
    %c2_66 = arith.constant 2 : index
    %c2_67 = arith.constant 2 : index
    %c0_68 = arith.constant 0 : index
    %c0_69 = arith.constant 0 : index
    %87 = vector.load %arg3[%c2_66, %c2_67, %c0_68, %c0_69] : memref<3x4x32x8xbf16, #tpu.memory_space<vmem>>, vector<1x1x32x8xbf16>
    %88 = vector.shape_cast %87 : vector<1x1x32x8xbf16> to vector<32x8xbf16>
    %cst_70 = arith.constant dense<0.000000e+00> : vector<8x8xf32>
    %89 = tpu.matmul %36, %88, %cst_70 {dimension_numbers = #tpu.dot_dimension_numbers<[1], [0], [0], [1], [0, 0, 1, 1], [], []>} : vector<8x32xbf16>, vector<32x8xbf16>, vector<8x8xf32> -> vector<8x8xf32>
    %c2_71 = arith.constant 2 : index
    %c3_72 = arith.constant 3 : index
    %c0_73 = arith.constant 0 : index
    %c0_74 = arith.constant 0 : index
    %90 = vector.load %arg3[%c2_71, %c3_72, %c0_73, %c0_74] : memref<3x4x32x8xbf16, #tpu.memory_space<vmem>>, vector<1x1x32x8xbf16>
    %91 = vector.shape_cast %90 : vector<1x1x32x8xbf16> to vector<32x8xbf16>
    %cst_75 = arith.constant dense<0.000000e+00> : vector<8x8xf32>
    %92 = tpu.matmul %36, %91, %cst_75 {dimension_numbers = #tpu.dot_dimension_numbers<[1], [0], [0], [1], [0, 0, 1, 1], [], []>} : vector<8x32xbf16>, vector<32x8xbf16>, vector<8x8xf32> -> vector<8x8xf32>
    %93 = vector.shape_cast %83 : vector<8x8xf32> to vector<1x8x8xf32>
    %94 = vector.shape_cast %86 : vector<8x8xf32> to vector<1x8x8xf32>
    %95 = vector.shape_cast %89 : vector<8x8xf32> to vector<1x8x8xf32>
    %96 = vector.shape_cast %92 : vector<8x8xf32> to vector<1x8x8xf32>
    %97 = tpu.concatenate %93, %94, %95, %96 in 0 : vector<1x8x8xf32>, vector<1x8x8xf32>, vector<1x8x8xf32>, vector<1x8x8xf32> -> vector<4x8x8xf32>
    %c2_76 = arith.constant 2 : index
    %c0_77 = arith.constant 0 : index
    %c0_78 = arith.constant 0 : index
    %c0_79 = arith.constant 0 : index
    %98 = vector.load %arg4[%c2_76, %c0_77, %c0_78, %c0_79] : memref<3x4x1x8xf32, #tpu.memory_space<vmem>>, vector<1x4x1x8xf32>
    %99 = vector.shape_cast %98 : vector<1x4x1x8xf32> to vector<4x1x8xf32>
    %100 = vector.broadcast %99 : vector<4x1x8xf32> to vector<4x8x8xf32>
    %101 = arith.addf %97, %100 : vector<4x8x8xf32>
    %102 = arith.truncf %101 : vector<4x8x8xf32> to vector<4x8x8xbf16>
    "tpu.trace_start"() <{level = 10 : i32, message = "hqd,hkd->hqk"}> : () -> ()
    %cst_80 = arith.constant dense<0.000000e+00> : vector<4x8x8xf32>
    %103 = tpu.matmul %58, %80, %cst_80 {dimension_numbers = #tpu.dot_dimension_numbers<[2], [2], [1], [1], [0, 0, 0, 1, 1, 1], [0], [0]>} : vector<4x8x8xbf16>, vector<4x8x8xbf16>, vector<4x8x8xf32> -> vector<4x8x8xf32>
    "tpu.trace_stop"() : () -> ()
    %cst_81 = arith.constant dense<0xFF800000> : vector<4x8xf32>
    %104 = vector.multi_reduction <maximumf>, %103, %cst_81 [2] : vector<4x8x8xf32> to vector<4x8xf32>
    %105 = vector.shape_cast %104 : vector<4x8xf32> to vector<4x8x1xf32>
    %106 = vector.broadcast %105 : vector<4x8x1xf32> to vector<4x8x8xf32>
    %107 = arith.subf %103, %106 : vector<4x8x8xf32>
    %108 = math.exp %107 : vector<4x8x8xf32>
    %cst_82 = arith.constant dense<0.000000e+00> : vector<4x8xf32>
    %109 = vector.multi_reduction <add>, %108, %cst_82 [2] : vector<4x8x8xf32> to vector<4x8xf32>
    %110 = vector.shape_cast %109 : vector<4x8xf32> to vector<4x8x1xf32>
    %111 = tpu.reciprocal %110 {approx = true} : vector<4x8x1xf32> -> vector<4x8x1xf32>
    %112 = vector.broadcast %111 : vector<4x8x1xf32> to vector<4x8x8xf32>
    %113 = arith.mulf %108, %112 : vector<4x8x8xf32>
    %114 = arith.truncf %113 : vector<4x8x8xf32> to vector<4x8x8xbf16>
    "tpu.trace_start"() <{level = 10 : i32, message = "hqk,hkd->hqd"}> : () -> ()
    %cst_83 = arith.constant dense<0.000000e+00> : vector<4x8x8xf32>
    %115 = tpu.matmul %114, %102, %cst_83 {dimension_numbers = #tpu.dot_dimension_numbers<[2], [1], [1], [2], [0, 0, 0, 1, 1, 2], [0], [0]>} : vector<4x8x8xbf16>, vector<4x8x8xbf16>, vector<4x8x8xf32> -> vector<4x8x8xf32>
    "tpu.trace_stop"() : () -> ()
    %116 = vector.extract_strided_slice %115 {offsets = [0, 0, 0], sizes = [1, 8, 8], strides = [1, 1, 1]} : vector<4x8x8xf32> to vector<1x8x8xf32>
    %117 = vector.shape_cast %116 : vector<1x8x8xf32> to vector<8x8xf32>
    %118 = arith.truncf %117 : vector<8x8xf32> to vector<8x8xbf16>
    %c0_84 = arith.constant 0 : index
    %c0_85 = arith.constant 0 : index
    %c0_86 = arith.constant 0 : index
    %119 = vector.load %arg5[%c0_84, %c0_85, %c0_86] : memref<4x8x32xbf16, #tpu.memory_space<vmem>>, vector<1x8x32xbf16>
    %120 = vector.shape_cast %119 : vector<1x8x32xbf16> to vector<8x32xbf16>
    %cst_87 = arith.constant dense<0.000000e+00> : vector<8x32xf32>
    %121 = tpu.matmul %118, %120, %cst_87 {dimension_numbers = #tpu.dot_dimension_numbers<[1], [0], [0], [1], [0, 0, 1, 1], [], []>} : vector<8x8xbf16>, vector<8x32xbf16>, vector<8x32xf32> -> vector<8x32xf32>
    %122 = vector.extract_strided_slice %115 {offsets = [1, 0, 0], sizes = [1, 8, 8], strides = [1, 1, 1]} : vector<4x8x8xf32> to vector<1x8x8xf32>
    %123 = vector.shape_cast %122 : vector<1x8x8xf32> to vector<8x8xf32>
    %124 = arith.truncf %123 : vector<8x8xf32> to vector<8x8xbf16>
    %c1_88 = arith.constant 1 : index
    %c0_89 = arith.constant 0 : index
    %c0_90 = arith.constant 0 : index
    %125 = vector.load %arg5[%c1_88, %c0_89, %c0_90] : memref<4x8x32xbf16, #tpu.memory_space<vmem>>, vector<1x8x32xbf16>
    %126 = vector.shape_cast %125 : vector<1x8x32xbf16> to vector<8x32xbf16>
    %cst_91 = arith.constant dense<0.000000e+00> : vector<8x32xf32>
    %127 = tpu.matmul %124, %126, %cst_91 {dimension_numbers = #tpu.dot_dimension_numbers<[1], [0], [0], [1], [0, 0, 1, 1], [], []>} : vector<8x8xbf16>, vector<8x32xbf16>, vector<8x32xf32> -> vector<8x32xf32>
    %128 = arith.addf %121, %127 : vector<8x32xf32>
    %129 = vector.extract_strided_slice %115 {offsets = [2, 0, 0], sizes = [1, 8, 8], strides = [1, 1, 1]} : vector<4x8x8xf32> to vector<1x8x8xf32>
    %130 = vector.shape_cast %129 : vector<1x8x8xf32> to vector<8x8xf32>
    %131 = arith.truncf %130 : vector<8x8xf32> to vector<8x8xbf16>
    %c2_92 = arith.constant 2 : index
    %c0_93 = arith.constant 0 : index
    %c0_94 = arith.constant 0 : index
    %132 = vector.load %arg5[%c2_92, %c0_93, %c0_94] : memref<4x8x32xbf16, #tpu.memory_space<vmem>>, vector<1x8x32xbf16>
    %133 = vector.shape_cast %132 : vector<1x8x32xbf16> to vector<8x32xbf16>
    %cst_95 = arith.constant dense<0.000000e+00> : vector<8x32xf32>
    %134 = tpu.matmul %131, %133, %cst_95 {dimension_numbers = #tpu.dot_dimension_numbers<[1], [0], [0], [1], [0, 0, 1, 1], [], []>} : vector<8x8xbf16>, vector<8x32xbf16>, vector<8x32xf32> -> vector<8x32xf32>
    %135 = arith.addf %128, %134 : vector<8x32xf32>
    %136 = vector.extract_strided_slice %115 {offsets = [3, 0, 0], sizes = [1, 8, 8], strides = [1, 1, 1]} : vector<4x8x8xf32> to vector<1x8x8xf32>
    %137 = vector.shape_cast %136 : vector<1x8x8xf32> to vector<8x8xf32>
    %138 = arith.truncf %137 : vector<8x8xf32> to vector<8x8xbf16>
    %c3_96 = arith.constant 3 : index
    %c0_97 = arith.constant 0 : index
    %c0_98 = arith.constant 0 : index
    %139 = vector.load %arg5[%c3_96, %c0_97, %c0_98] : memref<4x8x32xbf16, #tpu.memory_space<vmem>>, vector<1x8x32xbf16>
    %140 = vector.shape_cast %139 : vector<1x8x32xbf16> to vector<8x32xbf16>
    %cst_99 = arith.constant dense<0.000000e+00> : vector<8x32xf32>
    %141 = tpu.matmul %138, %140, %cst_99 {dimension_numbers = #tpu.dot_dimension_numbers<[1], [0], [0], [1], [0, 0, 1, 1], [], []>} : vector<8x8xbf16>, vector<8x32xbf16>, vector<8x32xf32> -> vector<8x32xf32>
    %142 = arith.addf %135, %141 : vector<8x32xf32>
    %c0_100 = arith.constant 0 : index
    %c0_101 = arith.constant 0 : index
    %143 = vector.load %arg6[%c0_100, %c0_101] : memref<1x32xf32, #tpu.memory_space<vmem>>, vector<1x32xf32>
    %144 = vector.broadcast %143 : vector<1x32xf32> to vector<8x32xf32>
    %145 = arith.addf %142, %144 : vector<8x32xf32>
    %146 = vector.broadcast %8 : vector<1x32xf32> to vector<8x32xf32>
    %147 = arith.mulf %146, %145 : vector<8x32xf32>
    %148 = arith.addf %1, %147 : vector<8x32xf32>
    %cst_102 = arith.constant dense<0.000000e+00> : vector<8xf32>
    %149 = vector.multi_reduction <add>, %148, %cst_102 [1] : vector<8x32xf32> to vector<8xf32>
    %150 = vector.shape_cast %149 : vector<8xf32> to vector<8x1xf32>
    %cst_103 = arith.constant 3.200000e+01 : f32
    %151 = vector.broadcast %cst_103 : f32 to vector<8x1xf32>
    %152 = arith.divf %150, %151 : vector<8x1xf32>
    %153 = vector.broadcast %152 : vector<8x1xf32> to vector<8x32xf32>
    %154 = arith.subf %148, %153 : vector<8x32xf32>
    %155 = arith.mulf %154, %154 : vector<8x32xf32>
    %cst_104 = arith.constant dense<0.000000e+00> : vector<8xf32>
    %156 = vector.multi_reduction <add>, %155, %cst_104 [1] : vector<8x32xf32> to vector<8xf32>
    %157 = vector.shape_cast %156 : vector<8xf32> to vector<8x1xf32>
    %cst_105 = arith.constant 3.200000e+01 : f32
    %158 = vector.broadcast %cst_105 : f32 to vector<8x1xf32>
    %159 = arith.divf %157, %158 : vector<8x1xf32>
    %160 = vector.broadcast %152 : vector<8x1xf32> to vector<8x32xf32>
    %161 = arith.subf %148, %160 : vector<8x32xf32>
    %cst_106 = arith.constant 9.99999997E-7 : f32
    %162 = vector.broadcast %cst_106 : f32 to vector<8x1xf32>
    %163 = arith.addf %159, %162 : vector<8x1xf32>
    %164 = math.rsqrt %163 : vector<8x1xf32>
    %165 = vector.broadcast %164 : vector<8x1xf32> to vector<8x32xf32>
    %166 = arith.mulf %161, %165 : vector<8x32xf32>
    %167 = vector.broadcast %12 : vector<1x32xf32> to vector<8x32xf32>
    %168 = arith.mulf %166, %167 : vector<8x32xf32>
    %169 = vector.broadcast %9 : vector<1x32xf32> to vector<8x32xf32>
    %170 = arith.addf %168, %169 : vector<8x32xf32>
    %171 = arith.truncf %170 : vector<8x32xf32> to vector<8x32xbf16>
    %c0_107 = arith.constant 0 : index
    %c0_108 = arith.constant 0 : index
    %172 = vector.load %arg7[%c0_107, %c0_108] : memref<32x128xbf16, #tpu.memory_space<vmem>>, vector<32x128xbf16>
    %cst_109 = arith.constant dense<0.000000e+00> : vector<8x128xf32>
    %173 = tpu.matmul %171, %172, %cst_109 {dimension_numbers = #tpu.dot_dimension_numbers<[1], [0], [0], [1], [0, 0, 1, 1], [], []>} : vector<8x32xbf16>, vector<32x128xbf16>, vector<8x128xf32> -> vector<8x128xf32>
    %c0_110 = arith.constant 0 : index
    %c0_111 = arith.constant 0 : index
    %174 = vector.load %arg8[%c0_110, %c0_111] : memref<1x128xf32, #tpu.memory_space<vmem>>, vector<1x128xf32>
    %175 = vector.broadcast %174 : vector<1x128xf32> to vector<8x128xf32>
    %176 = arith.addf %173, %175 : vector<8x128xf32>
    %cst_112 = arith.constant 5.000000e-01 : f32
    %177 = vector.broadcast %cst_112 : f32 to vector<8x128xf32>
    %178 = arith.mulf %177, %176 : vector<8x128xf32>
    %cst_113 = arith.constant 4.471500e-02 : f32
    %179 = vector.broadcast %cst_113 : f32 to vector<8x128xf32>
    %180 = arith.mulf %179, %176 : vector<8x128xf32>
    %181 = arith.mulf %180, %176 : vector<8x128xf32>
    %182 = arith.mulf %181, %176 : vector<8x128xf32>
    %183 = arith.addf %176, %182 : vector<8x128xf32>
    %cst_114 = arith.constant 0.797884583 : f32
    %184 = vector.broadcast %cst_114 : f32 to vector<8x128xf32>
    %185 = arith.mulf %184, %183 : vector<8x128xf32>
    %186 = math.tanh %185 : vector<8x128xf32>
    %cst_115 = arith.constant 1.000000e+00 : f32
    %187 = vector.broadcast %cst_115 : f32 to vector<8x128xf32>
    %188 = arith.addf %187, %186 : vector<8x128xf32>
    %189 = arith.mulf %178, %188 : vector<8x128xf32>
    %190 = arith.truncf %189 : vector<8x128xf32> to vector<8x128xbf16>
    %c0_116 = arith.constant 0 : index
    %c0_117 = arith.constant 0 : index
    %191 = vector.load %arg9[%c0_116, %c0_117] : memref<128x32xbf16, #tpu.memory_space<vmem>>, vector<128x32xbf16>
    %cst_118 = arith.constant dense<0.000000e+00> : vector<8x32xf32>
    %192 = tpu.matmul %190, %191, %cst_118 {dimension_numbers = #tpu.dot_dimension_numbers<[1], [0], [0], [1], [0, 0, 1, 1], [], []>} : vector<8x128xbf16>, vector<128x32xbf16>, vector<8x32xf32> -> vector<8x32xf32>
    %c0_119 = arith.constant 0 : index
    %c0_120 = arith.constant 0 : index
    %193 = vector.load %arg10[%c0_119, %c0_120] : memref<1x32xf32, #tpu.memory_space<vmem>>, vector<1x32xf32>
    %194 = vector.broadcast %193 : vector<1x32xf32> to vector<8x32xf32>
    %195 = arith.addf %192, %194 : vector<8x32xf32>
    %196 = vector.broadcast %13 : vector<1x32xf32> to vector<8x32xf32>
    %197 = arith.mulf %196, %195 : vector<8x32xf32>
    %198 = arith.addf %148, %197 : vector<8x32xf32>
    %c0_121 = arith.constant 0 : index
    %c0_122 = arith.constant 0 : index
    %c0_123 = arith.constant 0 : index
    %199 = vector.load %arg11[%c0_121, %c0_122, %c0_123] : memref<1x8x32xf32, #tpu.memory_space<vmem>>, vector<1x8x32xf32>
    %200 = vector.shape_cast %199 : vector<1x8x32xf32> to vector<8x32xf32>
    %201 = vector.shape_cast %198 : vector<8x32xf32> to vector<1x8x32xf32>
    tpu.vector_store %arg11[%c0_121, %c0_122, %c0_123], %201 {strides = array<i32>} : memref<1x8x32xf32, #tpu.memory_space<vmem>>, vector<1x8x32xf32>,
    return
  }
  func.func @transform_0(%arg0: i32) -> (i32, i32, i32) {
    %c0_i32 = arith.constant 0 : i32
    %c0_i32_0 = arith.constant 0 : i32
    %c0_i32_1 = arith.constant 0 : i32
    return %arg0, %c0_i32, %c0_i32_0 : i32, i32, i32
  }
  func.func @transform_1(%arg0: i32) -> (i32, i32, i32) {
    %c0_i32 = arith.constant 0 : i32
    %c0_i32_0 = arith.constant 0 : i32
    %c0_i32_1 = arith.constant 0 : i32
    return %arg0, %c0_i32, %c0_i32_0 : i32, i32, i32
  }
  func.func @transform_2(%arg0: i32) -> (i32, i32, i32, i32) {
    %c0_i32 = arith.constant 0 : i32
    %c0_i32_0 = arith.constant 0 : i32
    %c0_i32_1 = arith.constant 0 : i32
    %c0_i32_2 = arith.constant 0 : i32
    %c0_i32_3 = arith.constant 0 : i32
    return %c0_i32, %c0_i32_0, %c0_i32_1, %c0_i32_2 : i32, i32, i32, i32
  }
  func.func @transform_3(%arg0: i32) -> (i32, i32, i32, i32) {
    %c0_i32 = arith.constant 0 : i32
    %c0_i32_0 = arith.constant 0 : i32
    %c0_i32_1 = arith.constant 0 : i32
    %c0_i32_2 = arith.constant 0 : i32
    %c0_i32_3 = arith.constant 0 : i32
    return %c0_i32, %c0_i32_0, %c0_i32_1, %c0_i32_2 : i32, i32, i32, i32
  }
  func.func @transform_4(%arg0: i32) -> (i32, i32, i32) {
    %c0_i32 = arith.constant 0 : i32
    %c0_i32_0 = arith.constant 0 : i32
    %c0_i32_1 = arith.constant 0 : i32
    %c0_i32_2 = arith.constant 0 : i32
    return %c0_i32, %c0_i32_0, %c0_i32_1 : i32, i32, i32
  }
  func.func @transform_5(%arg0: i32) -> (i32, i32) {
    %c0_i32 = arith.constant 0 : i32
    %c0_i32_0 = arith.constant 0 : i32
    %c0_i32_1 = arith.constant 0 : i32
    return %c0_i32, %c0_i32_0 : i32, i32
  }
  func.func @transform_6(%arg0: i32) -> (i32, i32) {
    %c0_i32 = arith.constant 0 : i32
    %c0_i32_0 = arith.constant 0 : i32
    %c0_i32_1 = arith.constant 0 : i32
    return %c0_i32, %c0_i32_0 : i32, i32
  }
  func.func @transform_7(%arg0: i32) -> (i32, i32) {
    %c0_i32 = arith.constant 0 : i32
    %c0_i32_0 = arith.constant 0 : i32
    %c0_i32_1 = arith.constant 0 : i32
    return %c0_i32, %c0_i32_0 : i32, i32
  }
  func.func @transform_8(%arg0: i32) -> (i32, i32) {
    %c0_i32 = arith.constant 0 : i32
    %c0_i32_0 = arith.constant 0 : i32
    %c0_i32_1 = arith.constant 0 : i32
    return %c0_i32, %c0_i32_0 : i32, i32
  }
  func.func @transform_9(%arg0: i32) -> (i32, i32) {
    %c0_i32 = arith.constant 0 : i32
    %c0_i32_0 = arith.constant 0 : i32
    %c0_i32_1 = arith.constant 0 : i32
    return %c0_i32, %c0_i32_0 : i32, i32
  }
  func.func @transform_10(%arg0: i32) -> (i32, i32, i32) {
    %c0_i32 = arith.constant 0 : i32
    %c0_i32_0 = arith.constant 0 : i32
    %c0_i32_1 = arith.constant 0 : i32
    return %arg0, %c0_i32, %c0_i32_0 : i32, i32, i32
  }
}

</mosaic_0001>

<llo_original>
// kernel: tpu_custom_call.1
$region0: #{tpu_custom_call.1}
  #allocation0 [shape = 'u32[]', space=smem, size = 0x4, offset = 0x4, fixed_abs, tag = 'smem constant byte address 0x4 - core index']
  #allocation1 [shape = 'u32[72,128]{1,0:T(1,128)}', space=vmem, size = 0x9000, scoped, tag = 'internal scratch']
  %s0 = inlined_call_operand.vmem [shape: f32[2,8,32], index: 0, kind: input, shape index: {}]
  %s1 = inlined_call_operand.vmem [shape: f32[2,6,32], index: 1, kind: input, shape index: {}]
  %s2 = inlined_call_operand.vmem [shape: bf16[3,4,32,8], index: 2, kind: input, shape index: {}]
  %s3 = inlined_call_operand.vmem [shape: f32[3,4,1,8], index: 3, kind: input, shape index: {}]
  %s4 = inlined_call_operand.vmem [shape: bf16[4,8,32], index: 4, kind: input, shape index: {}]
  %s5 = inlined_call_operand.vmem [shape: f32[1,32], index: 5, kind: input, shape index: {}]
  %s6 = inlined_call_operand.vmem [shape: bf16[32,128], index: 6, kind: input, shape index: {}]
  %s7 = inlined_call_operand.vmem [shape: f32[1,128], index: 7, kind: input, shape index: {}]
  %s8 = inlined_call_operand.vmem [shape: bf16[128,32], index: 8, kind: input, shape index: {}]
  %s9 = inlined_call_operand.vmem [shape: f32[1,32], index: 9, kind: input, shape index: {}]
  %s10 = inlined_call_operand.hbm [shape: f32[2,8,32], index: 10, kind: output, shape index: {}]
  %s11 = sld [smem:[#allocation0]]
  $region73: #{tpu_custom_call.1} parent=0
    _
  %s13 = ssub.s32 1, %s11
  %s14 = scalar_select 0, %s13, %s11
  $region1: #{tpu_custom_call.1} parent=0
    #allocation2 [shape = 'u8[8192]{0}', space=vmem, size = 0x2000, scoped, tag = 'output window, operand 0']
    #allocation3 [shape = 's32[2]{0}', space=sflag, size = 0x8, scoped, tag = 'scoped memory for tpu_custom_call.1']
    %15 = vsyncpa [#allocation3], 0
    %s16 = scalar_lea.sflag [#allocation3], 1
    %17 = vsyncpa %s16, 0
    loop: start=0, step=1, limit=4
    $region2: #{tpu_custom_call.1} parent=1 // loop_pre_header
      _
    $region3: #{tpu_custom_call.1} parent=1 // loop_header
      %s19 = sphi 0, %s23
      %p20 = scmp.ge.s32.totalorder %s19, 4
      %s29 = sphi 0, %s31
      %s32 = sphi 0, %s29
      %s33 = sphi 0, %s32
      %s49 = sphi 0, %s33
      %s55 = sphi 0, %s57
      %s58 = sphi 0, %s55
      %s59 = sphi 0, %s58
      %s75 = sphi 0, %s59
      %s79 = sphi 0, %s79
      %s81 = sphi 0, %s79
      %s82 = sphi 0, %s81
      %s96 = sphi 0, %s82
      %s100 = sphi 0, %s100
      %s102 = sphi 0, %s100
      %s103 = sphi 0, %s102
      %s117 = sphi 0, %s103
      %s121 = sphi 0, %s121
      %s123 = sphi 0, %s121
      %s124 = sphi 0, %s123
      %s138 = sphi 0, %s124
      %s142 = sphi 0, %s142
      %s144 = sphi 0, %s142
      %s145 = sphi 0, %s144
      %s159 = sphi 0, %s145
      %s163 = sphi 0, %s163
      %s165 = sphi 0, %s163
      %s166 = sphi 0, %s165
      %s180 = sphi 0, %s166
      %s184 = sphi 0, %s184
      %s186 = sphi 0, %s184
      %s187 = sphi 0, %s186
      %s201 = sphi 0, %s187
      %s205 = sphi 0, %s205
      %s207 = sphi 0, %s205
      %s208 = sphi 0, %s207
      %s222 = sphi 0, %s208
      %s226 = sphi 0, %s226
      %s228 = sphi 0, %s226
      %s229 = sphi 0, %s228
      %s243 = sphi 0, %s229
      %s249 = sphi 0, %s251
      %s252 = sphi 0, %s249
      %s253 = sphi 0, %s252
      %s269 = sphi 0, %s253
    $region4: #{tpu_custom_call.1} parent=1 // loop_header_branch
      %22 = sbr.rel (%p20) target = $region8
    $region5: #{tpu_custom_call.1} parent=1 // loop_body
      %s24 = ssub.s32 %s19, 1
      %s25 = ssub.s32 %s19, 2
      %s26 = sadd.s32 %s19, 1
      %s27 = ssub.s32 %s19, %s26
      %p28 = scmp.eq.s32.totalorder %s27, 0
      %s30 = sadd.s32 %s29, 1
      %s31 = scalar_select %p28, %s29, %s30
      %p34 = pneg %p28
      %p35 = scmp.eq.s32.totalorder %s19, 1
      %p36 = por %p34, %p35
      %p37 = scmp.ne.s32.totalorder %s29, %s32
      %p38 = scmp.eq.s32.totalorder %s19, 0
      %p39 = por %p37, %p38
      %p40 = scmp.ne.s32.totalorder %s29, %s32
      %p41 = scmp.eq.s32.totalorder %s24, 1
      %p42 = por %p40, %p41
      %p43 = scmp.ne.s32.totalorder %s32, %s33
      %p44 = scmp.eq.s32.totalorder %s24, 0
      %p45 = por %p43, %p44
      %p46 = scmp.ne.s32.totalorder %s32, %s33
      %p47 = scmp.eq.s32.totalorder %s25, 1
      %p48 = por %p46, %p47
      %p50 = scmp.ne.s32.totalorder %s33, %s49
      %p51 = scmp.eq.s32.totalorder %s25, 0
      %p52 = por %p50, %p51
      %s53 = ssub.s32 %s19, %s26
      %p54 = scmp.eq.s32.totalorder %s53, 0
      %s56 = sadd.s32 %s55, 1
      %s57 = scalar_select %p54, %s55, %s56
      %p60 = pneg %p54
      %p61 = scmp.eq.s32.totalorder %s19, 1
      %p62 = por %p60, %p61
      %p63 = scmp.ne.s32.totalorder %s55, %s58
      %p64 = scmp.eq.s32.totalorder %s19, 0
      %p65 = por %p63, %p64
      %p66 = scmp.ne.s32.totalorder %s55, %s58
      %p67 = scmp.eq.s32.totalorder %s24, 1
      %p68 = por %p66, %p67
      %p69 = scmp.ne.s32.totalorder %s58, %s59
      %p70 = scmp.eq.s32.totalorder %s24, 0
      %p71 = por %p69, %p70
      %p72 = scmp.ne.s32.totalorder %s58, %s59
      %p73 = scmp.eq.s32.totalorder %s25, 1
      %p74 = por %p72, %p73
      %p76 = scmp.ne.s32.totalorder %s59, %s75
      %p77 = scmp.eq.s32.totalorder %s25, 0
      %p78 = por %p76, %p77
      %s80 = sadd.s32 %s79, 1
      %p83 = scmp.eq.s32.totalorder %s19, 1
      %p84 = scmp.ne.s32.totalorder %s79, %s81
      %p85 = scmp.eq.s32.totalorder %s19, 0
      %p86 = por %p84, %p85
      %p87 = scmp.ne.s32.totalorder %s79, %s81
      %p88 = scmp.eq.s32.totalorder %s24, 1
      %p89 = por %p87, %p88
      %p90 = scmp.ne.s32.totalorder %s81, %s82
      %p91 = scmp.eq.s32.totalorder %s24, 0
      %p92 = por %p90, %p91
      %p93 = scmp.ne.s32.totalorder %s81, %s82
      %p94 = scmp.eq.s32.totalorder %s25, 1
      %p95 = por %p93, %p94
      %p97 = scmp.ne.s32.totalorder %s82, %s96
      %p98 = scmp.eq.s32.totalorder %s25, 0
      %p99 = por %p97, %p98
      %s101 = sadd.s32 %s100, 1
      %p104 = scmp.eq.s32.totalorder %s19, 1
      %p105 = scmp.ne.s32.totalorder %s100, %s102
      %p106 = scmp.eq.s32.totalorder %s19, 0
      %p107 = por %p105, %p106
      %p108 = scmp.ne.s32.totalorder %s100, %s102
      %p109 = scmp.eq.s32.totalorder %s24, 1
      %p110 = por %p108, %p109
      %p111 = scmp.ne.s32.totalorder %s102, %s103
      %p112 = scmp.eq.s32.totalorder %s24, 0
      %p113 = por %p111, %p112
      %p114 = scmp.ne.s32.totalorder %s102, %s103
      %p115 = scmp.eq.s32.totalorder %s25, 1
      %p116 = por %p114, %p115
      %p118 = scmp.ne.s32.totalorder %s103, %s117
      %p119 = scmp.eq.s32.totalorder %s25, 0
      %p120 = por %p118, %p119
      %s122 = sadd.s32 %s121, 1
      %p125 = scmp.eq.s32.totalorder %s19, 1
      %p126 = scmp.ne.s32.totalorder %s121, %s123
      %p127 = scmp.eq.s32.totalorder %s19, 0
      %p128 = por %p126, %p127
      %p129 = scmp.ne.s32.totalorder %s121, %s123
      %p130 = scmp.eq.s32.totalorder %s24, 1
      %p131 = por %p129, %p130
      %p132 = scmp.ne.s32.totalorder %s123, %s124
      %p133 = scmp.eq.s32.totalorder %s24, 0
      %p134 = por %p132, %p133
      %p135 = scmp.ne.s32.totalorder %s123, %s124
      %p136 = scmp.eq.s32.totalorder %s25, 1
      %p137 = por %p135, %p136
      %p139 = scmp.ne.s32.totalorder %s124, %s138
      %p140 = scmp.eq.s32.totalorder %s25, 0
      %p141 = por %p139, %p140
      %s143 = sadd.s32 %s142, 1
      %p146 = scmp.eq.s32.totalorder %s19, 1
      %p147 = scmp.ne.s32.totalorder %s142, %s144
      %p148 = scmp.eq.s32.totalorder %s19, 0
      %p149 = por %p147, %p148
      %p150 = scmp.ne.s32.totalorder %s142, %s144
      %p151 = scmp.eq.s32.totalorder %s24, 1
      %p152 = por %p150, %p151
      %p153 = scmp.ne.s32.totalorder %s144, %s145
      %p154 = scmp.eq.s32.totalorder %s24, 0
      %p155 = por %p153, %p154
      %p156 = scmp.ne.s32.totalorder %s144, %s145
      %p157 = scmp.eq.s32.totalorder %s25, 1
      %p158 = por %p156, %p157
      %p160 = scmp.ne.s32.totalorder %s145, %s159
      %p161 = scmp.eq.s32.totalorder %s25, 0
      %p162 = por %p160, %p161
      %s164 = sadd.s32 %s163, 1
      %p167 = scmp.eq.s32.totalorder %s19, 1
      %p168 = scmp.ne.s32.totalorder %s163, %s165
      %p169 = scmp.eq.s32.totalorder %s19, 0
      %p170 = por %p168, %p169
      %p171 = scmp.ne.s32.totalorder %s163, %s165
      %p172 = scmp.eq.s32.totalorder %s24, 1
      %p173 = por %p171, %p172
      %p174 = scmp.ne.s32.totalorder %s165, %s166
      %p175 = scmp.eq.s32.totalorder %s24, 0
      %p176 = por %p174, %p175
      %p177 = scmp.ne.s32.totalorder %s165, %s166
      %p178 = scmp.eq.s32.totalorder %s25, 1
      %p179 = por %p177, %p178
      %p181 = scmp.ne.s32.totalorder %s166, %s180
      %p182 = scmp.eq.s32.totalorder %s25, 0
      %p183 = por %p181, %p182
      %s185 = sadd.s32 %s184, 1
      %p188 = scmp.eq.s32.totalorder %s19, 1
      %p189 = scmp.ne.s32.totalorder %s184, %s186
      %p190 = scmp.eq.s32.totalorder %s19, 0
      %p191 = por %p189, %p190
      %p192 = scmp.ne.s32.totalorder %s184, %s186
      %p193 = scmp.eq.s32.totalorder %s24, 1
      %p194 = por %p192, %p193
      %p195 = scmp.ne.s32.totalorder %s186, %s187
      %p196 = scmp.eq.s32.totalorder %s24, 0
      %p197 = por %p195, %p196
      %p198 = scmp.ne.s32.totalorder %s186, %s187
      %p199 = scmp.eq.s32.totalorder %s25, 1
      %p200 = por %p198, %p199
      %p202 = scmp.ne.s32.totalorder %s187, %s201
      %p203 = scmp.eq.s32.totalorder %s25, 0
      %p204 = por %p202, %p203
      %s206 = sadd.s32 %s205, 1
      %p209 = scmp.eq.s32.totalorder %s19, 1
      %p210 = scmp.ne.s32.totalorder %s205, %s207
      %p211 = scmp.eq.s32.totalorder %s19, 0
      %p212 = por %p210, %p211
      %p213 = scmp.ne.s32.totalorder %s205, %s207
      %p214 = scmp.eq.s32.totalorder %s24, 1
      %p215 = por %p213, %p214
      %p216 = scmp.ne.s32.totalorder %s207, %s208
      %p217 = scmp.eq.s32.totalorder %s24, 0
      %p218 = por %p216, %p217
      %p219 = scmp.ne.s32.totalorder %s207, %s208
      %p220 = scmp.eq.s32.totalorder %s25, 1
      %p221 = por %p219, %p220
      %p223 = scmp.ne.s32.totalorder %s208, %s222
      %p224 = scmp.eq.s32.totalorder %s25, 0
      %p225 = por %p223, %p224
      %s227 = sadd.s32 %s226, 1
      %p230 = scmp.eq.s32.totalorder %s19, 1
      %p231 = scmp.ne.s32.totalorder %s226, %s228
      %p232 = scmp.eq.s32.totalorder %s19, 0
      %p233 = por %p231, %p232
      %p234 = scmp.ne.s32.totalorder %s226, %s228
      %p235 = scmp.eq.s32.totalorder %s24, 1
      %p236 = por %p234, %p235
      %p237 = scmp.ne.s32.totalorder %s228, %s229
      %p238 = scmp.eq.s32.totalorder %s24, 0
      %p239 = por %p237, %p238
      %p240 = scmp.ne.s32.totalorder %s228, %s229
      %p241 = scmp.eq.s32.totalorder %s25, 1
      %p242 = por %p240, %p241
      %p244 = scmp.ne.s32.totalorder %s229, %s243
      %p245 = scmp.eq.s32.totalorder %s25, 0
      %p246 = por %p244, %p245
      %s247 = ssub.s32 %s19, %s26
      %p248 = scmp.eq.s32.totalorder %s247, 0
      %s250 = sadd.s32 %s249, 1
      %s251 = scalar_select %p248, %s249, %s250
      %p254 = pneg %p248
      %p255 = scmp.eq.s32.totalorder %s19, 1
      %p256 = por %p254, %p255
      %p257 = scmp.ne.s32.totalorder %s249, %s252
      %p258 = scmp.eq.s32.totalorder %s19, 0
      %p259 = por %p257, %p258
      %p260 = scmp.ne.s32.totalorder %s249, %s252
      %p261 = scmp.eq.s32.totalorder %s24, 1
      %p262 = por %p260, %p261
      %p263 = scmp.ne.s32.totalorder %s252, %s253
      %p264 = scmp.eq.s32.totalorder %s24, 0
      %p265 = por %p263, %p264
      %p266 = scmp.ne.s32.totalorder %s252, %s253
      %p267 = scmp.eq.s32.totalorder %s25, 1
      %p268 = por %p266, %p267
      %p270 = scmp.ne.s32.totalorder %s253, %s269
      %p271 = scmp.eq.s32.totalorder %s25, 0
      %p272 = por %p270, %p271
      %p273 = scmp.le.s32.totalorder 1, %s19
      %p274 = scmp.lt.s32.totalorder %s19, 3
      %p275 = pnand %p273, %p274
      %p276 = pneg %p275
      // Predicated region
      $region9: #{tpu_custom_call.1} parent=5 // pred_check
        _
      $region10: #{tpu_custom_call.1} parent=5 // pred_check_branch
        %278 = sbr.rel (%p275) target = $region12
      $region11: #{tpu_custom_call.1} parent=5 // pred_region
        %s279 = ssub.s32 %s19, 1
        // Predicated region
        $region13: #{tpu_custom_call.1} parent=11 // pred_check
          %p280 = pneg %p92
        $region14: #{tpu_custom_call.1} parent=11 // pred_check_branch
          %282 = sbr.rel (%p280) target = $region16
        $region15: #{tpu_custom_call.1} parent=11 // pred_region
          _
        $region16: #{tpu_custom_call.1} parent=11 // pred_fallthru
          _
        // Predicated region
        $region17: #{tpu_custom_call.1} parent=11 // pred_check
          %p283 = pneg %p113
        $region18: #{tpu_custom_call.1} parent=11 // pred_check_branch
          %285 = sbr.rel (%p283) target = $region20
        $region19: #{tpu_custom_call.1} parent=11 // pred_region
          _
        $region20: #{tpu_custom_call.1} parent=11 // pred_fallthru
          _
        // Predicated region
        $region21: #{tpu_custom_call.1} parent=11 // pred_check
          %p286 = pneg %p134
        $region22: #{tpu_custom_call.1} parent=11 // pred_check_branch
          %288 = sbr.rel (%p286) target = $region24
        $region23: #{tpu_custom_call.1} parent=11 // pred_region
          _
        $region24: #{tpu_custom_call.1} parent=11 // pred_fallthru
          _
        // Predicated region
        $region25: #{tpu_custom_call.1} parent=11 // pred_check
          %p289 = pneg %p155
        $region26: #{tpu_custom_call.1} parent=11 // pred_check_branch
          %291 = sbr.rel (%p289) target = $region28
        $region27: #{tpu_custom_call.1} parent=11 // pred_region
          _
        $region28: #{tpu_custom_call.1} parent=11 // pred_fallthru
          _
        // Predicated region
        $region29: #{tpu_custom_call.1} parent=11 // pred_check
          %p292 = pneg %p176
        $region30: #{tpu_custom_call.1} parent=11 // pred_check_branch
          %294 = sbr.rel (%p292) target = $region32
        $region31: #{tpu_custom_call.1} parent=11 // pred_region
          _
        $region32: #{tpu_custom_call.1} parent=11 // pred_fallthru
          _
        // Predicated region
        $region33: #{tpu_custom_call.1} parent=11 // pred_check
          %p295 = pneg %p197
        $region34: #{tpu_custom_call.1} parent=11 // pred_check_branch
          %297 = sbr.rel (%p295) target = $region36
        $region35: #{tpu_custom_call.1} parent=11 // pred_region
          _
        $region36: #{tpu_custom_call.1} parent=11 // pred_fallthru
          _
        // Predicated region
        $region37: #{tpu_custom_call.1} parent=11 // pred_check
          %p298 = pneg %p218
        $region38: #{tpu_custom_call.1} parent=11 // pred_check_branch
          %300 = sbr.rel (%p298) target = $region40
        $region39: #{tpu_custom_call.1} parent=11 // pred_region
          _
        $region40: #{tpu_custom_call.1} parent=11 // pred_fallthru
          _
        // Predicated region
        $region41: #{tpu_custom_call.1} parent=11 // pred_check
          %p301 = pneg %p239
        $region42: #{tpu_custom_call.1} parent=11 // pred_check_branch
          %303 = sbr.rel (%p301) target = $region44
        $region43: #{tpu_custom_call.1} parent=11 // pred_region
          _
        $region44: #{tpu_custom_call.1} parent=11 // pred_fallthru
          _
      $region12: #{tpu_custom_call.1} parent=5 // pred_fallthru
        _
      %p304 = scmp.lt.s32.totalorder %s19, 2
      // Predicated region
      $region45: #{tpu_custom_call.1} parent=5 // pred_check
        %p305 = pneg %p304
      $region46: #{tpu_custom_call.1} parent=5 // pred_check_branch
        %307 = sbr.rel (%p305) target = $region48
      $region47: #{tpu_custom_call.1} parent=5 // pred_region
        // Predicated region
        $region49: #{tpu_custom_call.1} parent=47 // pred_check
          %p308 = pneg %p39
        $region50: #{tpu_custom_call.1} parent=47 // pred_check_branch
          %310 = sbr.rel (%p308) target = $region52
        $region51: #{tpu_custom_call.1} parent=47 // pred_region
          %p311 = scmp.lt.s32.totalorder %s19, 1
          %s312 = scalar_select %p311, %s19, 1
          %s313 = smul.addr %s312, 8
          %s314 = scalar_lea.vmem %s0, %s313
        $region52: #{tpu_custom_call.1} parent=47 // pred_fallthru
          _
        // Predicated region
        $region53: #{tpu_custom_call.1} parent=47 // pred_check
          %p315 = pneg %p65
        $region54: #{tpu_custom_call.1} parent=47 // pred_check_branch
          %317 = sbr.rel (%p315) target = $region56
        $region55: #{tpu_custom_call.1} parent=47 // pred_region
          %p318 = scmp.lt.s32.totalorder %s19, 1
          %s319 = scalar_select %p318, %s19, 1
          %s320 = smul.addr %s319, 8
          %s321 = scalar_lea.vmem %s1, %s320
        $region56: #{tpu_custom_call.1} parent=47 // pred_fallthru
          _
      $region48: #{tpu_custom_call.1} parent=5 // pred_fallthru
        _
      %p322 = scmp.le.s32.totalorder 1, %s19
      %p323 = scmp.lt.s32.totalorder %s19, 3
      %p324 = pnand %p322, %p323
      %p325 = pneg %p324
      // Predicated region
      $region57: #{tpu_custom_call.1} parent=5 // pred_check
        _
      $region58: #{tpu_custom_call.1} parent=5 // pred_check_branch
        %327 = sbr.rel (%p324) target = $region60
      $region59: #{tpu_custom_call.1} parent=5 // pred_region
        %s328 = ssub.s32 %s19, 1
        %p329 = scmp.lt.s32.totalorder %s24, 1
        %s330 = scalar_select %p329, %s24, 1
        %s331 = smul.addr %s330, 8
        %s332 = scalar_lea.vmem %s0, %s331
        %p333 = pneg %p45
        %p334 = pneg %p42
        %p335 = scmp.lt.s32.totalorder %s24, 1
        %s336 = scalar_select %p335, %s24, 1
        %s337 = smul.addr %s336, 8
        %s338 = scalar_lea.vmem %s1, %s337
        %p339 = pneg %p71
        %p340 = pneg %p68
        %p341 = pneg %p92
        %p342 = pneg %p89
        %p343 = pneg %p113
        %p344 = pneg %p110
        %p345 = pneg %p134
        %p346 = pneg %p131
        %p347 = pneg %p155
        %p348 = pneg %p152
        %p349 = pneg %p176
        %p350 = pneg %p173
        %p351 = pneg %p197
        %p352 = pneg %p194
        %p353 = pneg %p218
        %p354 = pneg %p215
        %p355 = pneg %p239
        %p356 = pneg %p236
        %p357 = pneg %p265
        %p358 = pneg %p262
        %s359 = sand.u32 %s252, 1
        %s360 = scalar_lea.sflag [#allocation3], %s359
        %s361 = sand.u32 %s252, 1
        %s362 = smul.addr %s361, 8
        %s363 = scalar_lea.vmem [#allocation2], %s362
        %p364 = scmp.lt.s32.totalorder %s24, 1
        %s365 = scalar_select %p364, %s24, 1
        %s366 = smul.addr %s365, 8
        %s367 = scalar_lea.vmem %s0, %s366
        %p368 = scmp.lt.s32.totalorder %s24, 1
        %s369 = scalar_select %p368, %s24, 1
        %s370 = smul.addr %s369, 8
        %s371 = scalar_lea.vmem %s1, %s370
        %v373 = vld [vmem:[%s367] sm:$0xff]
        %v374 = vld [vmem:[%s371] sm:$0x3f]
        %v375 = vadd.f32 %v374, 1.0
        %vm376 = vcmask 261120
        %v377 = vsel %vm376, %v373, 0.0
        %378 = vadd.xlane.f32.xlu0 %v377
        %v379 = vpop.xlane.xlu0 %378
        %v380 = vrcp.pop 32.0
        %v381 = vmul.f32 32.0, %v380
        %v382 = vsub.f32 1.0, %v381
        %v383 = vmul.f32 %v380, %v382
        %v384 = vadd.f32 %v380, %v383
        %vm385 = vweird.f32 %v380
        %v386 = vsel %vm385, %v380, %v384
        %v387 = vmul.f32 %v379, %v386
        %v388 = vsub.f32 %v373, %v387
        %v389 = vmul.f32 %v388, %v388
        %v390 = vsel %vm376, %v389, 0.0
        %391 = vadd.xlane.f32.xlu0 %v390
        %v392 = vpop.xlane.xlu0 %391
        %v393 = vmul.f32 %v392, %v386
        %v394 = vadd.f32 %v393, 1e-06
        %v395 = vrsqrt.pop %v394
        %v396 = vmul.f32 %v395, %v394
        %v397 = vmul.f32 %v396, %v395
        %v398 = vmul.f32 0.5, %v397
        %v399 = vsub.f32 1.5, %v398
        %v400 = vmul.f32 %v395, %v399
        %vm401 = vweird.f32 %v394
        %vm402 = vweird.f32 %v395
        %vm403 = vmor %vm401, %vm402
        %v404 = vsel %vm403, %v395, %v400
        %v405 = vmul.f32 %v388, %v404
        %v406 = vperm.slane %v375, 1
        %v407 = vmul.f32 %v405, %v406
        %v408 = vperm.slane %v374, 0
        %v409 = vadd.f32 %v407, %v408
        %v410 = vpack.c.bf16 %v409, %v409
        %v411 = vld [vmem:[%s2] sm:$0xf]
        %v412 = vld [vmem:[%s2 + $0x4] sm:$0xf]
        %v413 = vld [vmem:[%s2 + $0x8] sm:$0xf]
        %v414 = vld [vmem:[%s2 + $0xc] sm:$0xf]
        %v419 = vunpack.c.l.b16 %v411
        %v420 = vunpack.c.l.b16 %v412
        %v421 = vunpack.c.l.b16 %v413
        %v422 = vunpack.c.l.b16 %v414
        %v423 = vpack.c.b16 %v420, %v419
        %v424 = vpack.c.b16 %v422, %v421
        %v428 = vsel %vm376, %v410, 0
        %430 = vmatpush.bf16.msra.mxu0 0
        %431 = vmatpush.bf16.msra.mxu0 0
        %432 = vmatpush.bf16.msra.mxu0 0
        %433 = vmatpush.bf16.msra.mxu0 0
        %434 = vmatpush.bf16.msra.mxu0 0
        %435 = vmatpush.bf16.msra.mxu0 0
        %436 = vmatpush.bf16.msra.mxu0 %v424
        %437 = vmatpush.bf16.msra.mxu0 %v423
        %438 = vmatmul.bf16.gmra.mxu0 %v428
        %v439 = vpop.f32.mrf.mxu0
        %v440 = vadd.f32 0.0, %v439
        %v441 = vpop.f32.mrf.mxu0
        %442 = vdwg.mxu0
        %s443 = scalar_lea.vmem %s2, 16
        %v444 = vld [vmem:[%s443] sm:$0xf]
        %v445 = vld [vmem:[%s443 + $0x4] sm:$0xf]
        %v446 = vld [vmem:[%s443 + $0x8] sm:$0xf]
        %v447 = vld [vmem:[%s443 + $0xc] sm:$0xf]
        %v452 = vunpack.c.l.b16 %v444
        %v453 = vunpack.c.l.b16 %v445
        %v454 = vunpack.c.l.b16 %v446
        %v455 = vunpack.c.l.b16 %v447
        %v456 = vpack.c.b16 %v453, %v452
        %v457 = vpack.c.b16 %v455, %v454
        %460 = vmatpush.bf16.msra.mxu0 0
        %461 = vmatpush.bf16.msra.mxu0 0
        %462 = vmatpush.bf16.msra.mxu0 0
        %463 = vmatpush.bf16.msra.mxu0 0
        %464 = vmatpush.bf16.msra.mxu0 0
        %465 = vmatpush.bf16.msra.mxu0 0
        %466 = vmatpush.bf16.msra.mxu0 %v457
        %467 = vmatpush.bf16.msra.mxu0 %v456
        %468 = vmatmul.bf16.gmra.mxu0 %v428
        %v469 = vpop.f32.mrf.mxu0
        %v470 = vadd.f32 0.0, %v469
        %v471 = vpop.f32.mrf.mxu0
        %472 = vdwg.mxu0
        %s473 = scalar_lea.vmem %s2, 32
        %v474 = vld [vmem:[%s473] sm:$0xf]
        %v475 = vld [vmem:[%s473 + $0x4] sm:$0xf]
        %v476 = vld [vmem:[%s473 + $0x8] sm:$0xf]
        %v477 = vld [vmem:[%s473 + $0xc] sm:$0xf]
        %v482 = vunpack.c.l.b16 %v474
        %v483 = vunpack.c.l.b16 %v475
        %v484 = vunpack.c.l.b16 %v476
        %v485 = vunpack.c.l.b16 %v477
        %v486 = vpack.c.b16 %v483, %v482
        %v487 = vpack.c.b16 %v485, %v484
        %490 = vmatpush.bf16.msra.mxu0 0
        %491 = vmatpush.bf16.msra.mxu0 0
        %492 = vmatpush.bf16.msra.mxu0 0
        %493 = vmatpush.bf16.msra.mxu0 0
        %494 = vmatpush.bf16.msra.mxu0 0
        %495 = vmatpush.bf16.msra.mxu0 0
        %496 = vmatpush.bf16.msra.mxu0 %v487
        %497 = vmatpush.bf16.msra.mxu0 %v486
        %498 = vmatmul.bf16.gmra.mxu0 %v428
        %v499 = vpop.f32.mrf.mxu0
        %v500 = vadd.f32 0.0, %v499
        %v501 = vpop.f32.mrf.mxu0
        %502 = vdwg.mxu0
        %s503 = scalar_lea.vmem %s2, 48
        %v504 = vld [vmem:[%s503] sm:$0xf]
        %v505 = vld [vmem:[%s503 + $0x4] sm:$0xf]
        %v506 = vld [vmem:[%s503 + $0x8] sm:$0xf]
        %v507 = vld [vmem:[%s503 + $0xc] sm:$0xf]
        %v512 = vunpack.c.l.b16 %v504
        %v513 = vunpack.c.l.b16 %v505
        %v514 = vunpack.c.l.b16 %v506
        %v515 = vunpack.c.l.b16 %v507
        %v516 = vpack.c.b16 %v513, %v512
        %v517 = vpack.c.b16 %v515, %v514
        %520 = vmatpush.bf16.msra.mxu0 0
        %521 = vmatpush.bf16.msra.mxu0 0
        %522 = vmatpush.bf16.msra.mxu0 0
        %523 = vmatpush.bf16.msra.mxu0 0
        %524 = vmatpush.bf16.msra.mxu0 0
        %525 = vmatpush.bf16.msra.mxu0 0
        %526 = vmatpush.bf16.msra.mxu0 %v517
        %527 = vmatpush.bf16.msra.mxu0 %v516
        %528 = vmatmul.bf16.gmra.mxu0 %v428
        %v529 = vpop.f32.mrf.mxu0
        %v530 = vadd.f32 0.0, %v529
        %v531 = vpop.f32.mrf.mxu0
        %532 = vdwg.mxu0
        %v533 = vld [vmem:[%s3] sm:$0x1]
        %v534 = vld [vmem:[%s3 + $0x1] sm:$0x1]
        %v535 = vld [vmem:[%s3 + $0x2] sm:$0x1]
        %v536 = vld [vmem:[%s3 + $0x3] sm:$0x1]
        %v541 = vperm.slane %v533, 0
        %v542 = vperm.slane %v534, 0
        %v543 = vperm.slane %v535, 0
        %v544 = vperm.slane %v536, 0
        %v549 = vadd.f32 %v440, %v541
        %v550 = vadd.f32 %v470, %v542
        %v551 = vadd.f32 %v500, %v543
        %v552 = vadd.f32 %v530, %v544
        %v553 = vpack.c.bf16 %v549, %v549
        %v554 = vpack.c.bf16 %v550, %v550
        %v555 = vpack.c.bf16 %v551, %v551
        %v556 = vpack.c.bf16 %v552, %v552
        %s557 = scalar_lea.vmem %s2, 64
        %v558 = vld [vmem:[%s557] sm:$0xf]
        %v559 = vld [vmem:[%s557 + $0x4] sm:$0xf]
        %v560 = vld [vmem:[%s557 + $0x8] sm:$0xf]
        %v561 = vld [vmem:[%s557 + $0xc] sm:$0xf]
        %v566 = vunpack.c.l.b16 %v558
        %v567 = vunpack.c.l.b16 %v559
        %v568 = vunpack.c.l.b16 %v560
        %v569 = vunpack.c.l.b16 %v561
        %v570 = vpack.c.b16 %v567, %v566
        %v571 = vpack.c.b16 %v569, %v568
        %574 = vmatpush.bf16.msra.mxu0 0
        %575 = vmatpush.bf16.msra.mxu0 0
        %576 = vmatpush.bf16.msra.mxu0 0
        %577 = vmatpush.bf16.msra.mxu0 0
        %578 = vmatpush.bf16.msra.mxu0 0
        %579 = vmatpush.bf16.msra.mxu0 0
        %580 = vmatpush.bf16.msra.mxu0 %v571
        %581 = vmatpush.bf16.msra.mxu0 %v570
        %582 = vmatmul.bf16.gmra.mxu0 %v428
        %v583 = vpop.f32.mrf.mxu0
        %v584 = vadd.f32 0.0, %v583
        %v585 = vpop.f32.mrf.mxu0
        %586 = vdwg.mxu0
        %s587 = scalar_lea.vmem %s2, 80
        %v588 = vld [vmem:[%s587] sm:$0xf]
        %v589 = vld [vmem:[%s587 + $0x4] sm:$0xf]
        %v590 = vld [vmem:[%s587 + $0x8] sm:$0xf]
        %v591 = vld [vmem:[%s587 + $0xc] sm:$0xf]
        %v596 = vunpack.c.l.b16 %v588
        %v597 = vunpack.c.l.b16 %v589
        %v598 = vunpack.c.l.b16 %v590
        %v599 = vunpack.c.l.b16 %v591
        %v600 = vpack.c.b16 %v597, %v596
        %v601 = vpack.c.b16 %v599, %v598
        %604 = vmatpush.bf16.msra.mxu0 0
        %605 = vmatpush.bf16.msra.mxu0 0
        %606 = vmatpush.bf16.msra.mxu0 0
        %607 = vmatpush.bf16.msra.mxu0 0
        %608 = vmatpush.bf16.msra.mxu0 0
        %609 = vmatpush.bf16.msra.mxu0 0
        %610 = vmatpush.bf16.msra.mxu0 %v601
        %611 = vmatpush.bf16.msra.mxu0 %v600
        %612 = vmatmul.bf16.gmra.mxu0 %v428
        %v613 = vpop.f32.mrf.mxu0
        %v614 = vadd.f32 0.0, %v613
        %v615 = vpop.f32.mrf.mxu0
        %616 = vdwg.mxu0
        %s617 = scalar_lea.vmem %s2, 96
        %v618 = vld [vmem:[%s617] sm:$0xf]
        %v619 = vld [vmem:[%s617 + $0x4] sm:$0xf]
        %v620 = vld [vmem:[%s617 + $0x8] sm:$0xf]
        %v621 = vld [vmem:[%s617 + $0xc] sm:$0xf]
        %v626 = vunpack.c.l.b16 %v618
        %v627 = vunpack.c.l.b16 %v619
        %v628 = vunpack.c.l.b16 %v620
        %v629 = vunpack.c.l.b16 %v621
        %v630 = vpack.c.b16 %v627, %v626
        %v631 = vpack.c.b16 %v629, %v628
        %634 = vmatpush.bf16.msra.mxu0 0
        %635 = vmatpush.bf16.msra.mxu0 0
        %636 = vmatpush.bf16.msra.mxu0 0
        %637 = vmatpush.bf16.msra.mxu0 0
        %638 = vmatpush.bf16.msra.mxu0 0
        %639 = vmatpush.bf16.msra.mxu0 0
        %640 = vmatpush.bf16.msra.mxu0 %v631
        %641 = vmatpush.bf16.msra.mxu0 %v630
        %642 = vmatmul.bf16.gmra.mxu0 %v428
        %v643 = vpop.f32.mrf.mxu0
        %v644 = vadd.f32 0.0, %v643
        %v645 = vpop.f32.mrf.mxu0
        %646 = vdwg.mxu0
        %s647 = scalar_lea.vmem %s2, 112
        %v648 = vld [vmem:[%s647] sm:$0xf]
        %v649 = vld [vmem:[%s647 + $0x4] sm:$0xf]
        %v650 = vld [vmem:[%s647 + $0x8] sm:$0xf]
        %v651 = vld [vmem:[%s647 + $0xc] sm:$0xf]
        %v656 = vunpack.c.l.b16 %v648
        %v657 = vunpack.c.l.b16 %v649
        %v658 = vunpack.c.l.b16 %v650
        %v659 = vunpack.c.l.b16 %v651
        %v660 = vpack.c.b16 %v657, %v656
        %v661 = vpack.c.b16 %v659, %v658
        %664 = vmatpush.bf16.msra.mxu0 0
        %665 = vmatpush.bf16.msra.mxu0 0
        %666 = vmatpush.bf16.msra.mxu0 0
        %667 = vmatpush.bf16.msra.mxu0 0
        %668 = vmatpush.bf16.msra.mxu0 0
        %669 = vmatpush.bf16.msra.mxu0 0
        %670 = vmatpush.bf16.msra.mxu0 %v661
        %671 = vmatpush.bf16.msra.mxu0 %v660
        %672 = vmatmul.bf16.gmra.mxu0 %v428
        %v673 = vpop.f32.mrf.mxu0
        %v674 = vadd.f32 0.0, %v673
        %v675 = vpop.f32.mrf.mxu0
        %676 = vdwg.mxu0
        %s677 = scalar_lea.vmem %s3, 4
        %v678 = vld [vmem:[%s677] sm:$0x1]
        %v679 = vld [vmem:[%s677 + $0x1] sm:$0x1]
        %v680 = vld [vmem:[%s677 + $0x2] sm:$0x1]
        %v681 = vld [vmem:[%s677 + $0x3] sm:$0x1]
        %v686 = vperm.slane %v678, 0
        %v687 = vperm.slane %v679, 0
        %v688 = vperm.slane %v680, 0
        %v689 = vperm.slane %v681, 0
        %v694 = vadd.f32 %v584, %v686
        %v695 = vadd.f32 %v614, %v687
        %v696 = vadd.f32 %v644, %v688
        %v697 = vadd.f32 %v674, %v689
        %v698 = vpack.c.bf16 %v694, %v694
        %v699 = vpack.c.bf16 %v695, %v695
        %v700 = vpack.c.bf16 %v696, %v696
        %v701 = vpack.c.bf16 %v697, %v697
        %s702 = scalar_lea.vmem %s2, 128
        %v703 = vld [vmem:[%s702] sm:$0xf]
        %v704 = vld [vmem:[%s702 + $0x4] sm:$0xf]
        %v705 = vld [vmem:[%s702 + $0x8] sm:$0xf]
        %v706 = vld [vmem:[%s702 + $0xc] sm:$0xf]
        %v711 = vunpack.c.l.b16 %v703
        %v712 = vunpack.c.l.b16 %v704
        %v713 = vunpack.c.l.b16 %v705
        %v714 = vunpack.c.l.b16 %v706
        %v715 = vpack.c.b16 %v712, %v711
        %v716 = vpack.c.b16 %v714, %v713
        %719 = vmatpush.bf16.msra.mxu0 0
        %720 = vmatpush.bf16.msra.mxu0 0
        %721 = vmatpush.bf16.msra.mxu0 0
        %722 = vmatpush.bf16.msra.mxu0 0
        %723 = vmatpush.bf16.msra.mxu0 0
        %724 = vmatpush.bf16.msra.mxu0 0
        %725 = vmatpush.bf16.msra.mxu0 %v716
        %726 = vmatpush.bf16.msra.mxu0 %v715
        %727 = vmatmul.bf16.gmra.mxu0 %v428
        %v728 = vpop.f32.mrf.mxu0
        %v729 = vadd.f32 0.0, %v728
        %v730 = vpop.f32.mrf.mxu0
        %731 = vdwg.mxu0
        %s732 = scalar_lea.vmem %s2, 144
        %v733 = vld [vmem:[%s732] sm:$0xf]
        %v734 = vld [vmem:[%s732 + $0x4] sm:$0xf]
        %v735 = vld [vmem:[%s732 + $0x8] sm:$0xf]
        %v736 = vld [vmem:[%s732 + $0xc] sm:$0xf]
        %v741 = vunpack.c.l.b16 %v733
        %v742 = vunpack.c.l.b16 %v734
        %v743 = vunpack.c.l.b16 %v735
        %v744 = vunpack.c.l.b16 %v736
        %v745 = vpack.c.b16 %v742, %v741
        %v746 = vpack.c.b16 %v744, %v743
        %749 = vmatpush.bf16.msra.mxu0 0
        %750 = vmatpush.bf16.msra.mxu0 0
        %751 = vmatpush.bf16.msra.mxu0 0
        %752 = vmatpush.bf16.msra.mxu0 0
        %753 = vmatpush.bf16.msra.mxu0 0
        %754 = vmatpush.bf16.msra.mxu0 0
        %755 = vmatpush.bf16.msra.mxu0 %v746
        %756 = vmatpush.bf16.msra.mxu0 %v745
        %757 = vmatmul.bf16.gmra.mxu0 %v428
        %v758 = vpop.f32.mrf.mxu0
        %v759 = vadd.f32 0.0, %v758
        %v760 = vpop.f32.mrf.mxu0
        %761 = vdwg.mxu0
        %s762 = scalar_lea.vmem %s2, 160
        %v763 = vld [vmem:[%s762] sm:$0xf]
        %v764 = vld [vmem:[%s762 + $0x4] sm:$0xf]
        %v765 = vld [vmem:[%s762 + $0x8] sm:$0xf]
        %v766 = vld [vmem:[%s762 + $0xc] sm:$0xf]
        %v771 = vunpack.c.l.b16 %v763
        %v772 = vunpack.c.l.b16 %v764
        %v773 = vunpack.c.l.b16 %v765
        %v774 = vunpack.c.l.b16 %v766
        %v775 = vpack.c.b16 %v772, %v771
        %v776 = vpack.c.b16 %v774, %v773
        %779 = vmatpush.bf16.msra.mxu0 0
        %780 = vmatpush.bf16.msra.mxu0 0
        %781 = vmatpush.bf16.msra.mxu0 0
        %782 = vmatpush.bf16.msra.mxu0 0
        %783 = vmatpush.bf16.msra.mxu0 0
        %784 = vmatpush.bf16.msra.mxu0 0
        %785 = vmatpush.bf16.msra.mxu0 %v776
        %786 = vmatpush.bf16.msra.mxu0 %v775
        %787 = vmatmul.bf16.gmra.mxu0 %v428
        %v788 = vpop.f32.mrf.mxu0
        %v789 = vadd.f32 0.0, %v788
        %v790 = vpop.f32.mrf.mxu0
        %791 = vdwg.mxu0
        %s792 = scalar_lea.vmem %s2, 176
        %v793 = vld [vmem:[%s792] sm:$0xf]
        %v794 = vld [vmem:[%s792 + $0x4] sm:$0xf]
        %v795 = vld [vmem:[%s792 + $0x8] sm:$0xf]
        %v796 = vld [vmem:[%s792 + $0xc] sm:$0xf]
        %v801 = vunpack.c.l.b16 %v793
        %v802 = vunpack.c.l.b16 %v794
        %v803 = vunpack.c.l.b16 %v795
        %v804 = vunpack.c.l.b16 %v796
        %v805 = vpack.c.b16 %v802, %v801
        %v806 = vpack.c.b16 %v804, %v803
        %809 = vmatpush.bf16.msra.mxu0 0
        %810 = vmatpush.bf16.msra.mxu0 0
        %811 = vmatpush.bf16.msra.mxu0 0
        %812 = vmatpush.bf16.msra.mxu0 0
        %813 = vmatpush.bf16.msra.mxu0 0
        %814 = vmatpush.bf16.msra.mxu0 0
        %815 = vmatpush.bf16.msra.mxu0 %v806
        %816 = vmatpush.bf16.msra.mxu0 %v805
        %817 = vmatmul.bf16.gmra.mxu0 %v428
        %v818 = vpop.f32.mrf.mxu0
        %v819 = vadd.f32 0.0, %v818
        %v820 = vpop.f32.mrf.mxu0
        %821 = vdwg.mxu0
        %s822 = scalar_lea.vmem %s3, 8
        %v823 = vld [vmem:[%s822] sm:$0x1]
        %v824 = vld [vmem:[%s822 + $0x1] sm:$0x1]
        %v825 = vld [vmem:[%s822 + $0x2] sm:$0x1]
        %v826 = vld [vmem:[%s822 + $0x3] sm:$0x1]
        %v831 = vperm.slane %v823, 0
        %v832 = vperm.slane %v824, 0
        %v833 = vperm.slane %v825, 0
        %v834 = vperm.slane %v826, 0
        %v839 = vadd.f32 %v729, %v831
        %v840 = vadd.f32 %v759, %v832
        %v841 = vadd.f32 %v789, %v833
        %v842 = vadd.f32 %v819, %v834
        %v843 = vpack.c.bf16 %v839, %v839
        %v844 = vpack.c.bf16 %v840, %v840
        %v845 = vpack.c.bf16 %v841, %v841
        %v846 = vpack.c.bf16 %v842, %v842
        %vm847 = vcmask 64512
        %v849 = vsel %vm847, %v553, 0
        %v852 = vsel %vm847, %v698, 0
        %854 = vmatpush.bf16.xpose.msra.mxu0 0
        %855 = vmatpush.bf16.xpose.msra.mxu0 0
        %856 = vmatpush.bf16.xpose.msra.mxu0 0
        %857 = vmatpush.bf16.xpose.msra.mxu0 0
        %858 = vmatpush.bf16.xpose.msra.mxu0 0
        %859 = vmatpush.bf16.xpose.msra.mxu0 0
        %860 = vmatpush.bf16.xpose.msra.mxu0 0
        %861 = vmatpush.bf16.xpose.msra.mxu0 %v852
        %862 = vmatmul.bf16.gmra.mxu0 %v849
        %v863 = vpop.f32.mrf.mxu0
        %v864 = vadd.f32 0.0, %v863
        %v865 = vpop.f32.mrf.mxu0
        %866 = vdwg.mxu0
        %v868 = vsel %vm847, %v554, 0
        %v871 = vsel %vm847, %v699, 0
        %873 = vmatpush.bf16.xpose.msra.mxu0 0
        %874 = vmatpush.bf16.xpose.msra.mxu0 0
        %875 = vmatpush.bf16.xpose.msra.mxu0 0
        %876 = vmatpush.bf16.xpose.msra.mxu0 0
        %877 = vmatpush.bf16.xpose.msra.mxu0 0
        %878 = vmatpush.bf16.xpose.msra.mxu0 0
        %879 = vmatpush.bf16.xpose.msra.mxu0 0
        %880 = vmatpush.bf16.xpose.msra.mxu0 %v871
        %881 = vmatmul.bf16.gmra.mxu0 %v868
        %v882 = vpop.f32.mrf.mxu0
        %v883 = vadd.f32 0.0, %v882
        %v884 = vpop.f32.mrf.mxu0
        %885 = vdwg.mxu0
        %v887 = vsel %vm847, %v555, 0
        %v890 = vsel %vm847, %v700, 0
        %892 = vmatpush.bf16.xpose.msra.mxu0 0
        %893 = vmatpush.bf16.xpose.msra.mxu0 0
        %894 = vmatpush.bf16.xpose.msra.mxu0 0
        %895 = vmatpush.bf16.xpose.msra.mxu0 0
        %896 = vmatpush.bf16.xpose.msra.mxu0 0
        %897 = vmatpush.bf16.xpose.msra.mxu0 0
        %898 = vmatpush.bf16.xpose.msra.mxu0 0
        %899 = vmatpush.bf16.xpose.msra.mxu0 %v890
        %900 = vmatmul.bf16.gmra.mxu0 %v887
        %v901 = vpop.f32.mrf.mxu0
        %v902 = vadd.f32 0.0, %v901
        %v903 = vpop.f32.mrf.mxu0
        %904 = vdwg.mxu0
        %v906 = vsel %vm847, %v556, 0
        %v909 = vsel %vm847, %v701, 0
        %911 = vmatpush.bf16.xpose.msra.mxu0 0
        %912 = vmatpush.bf16.xpose.msra.mxu0 0
        %913 = vmatpush.bf16.xpose.msra.mxu0 0
        %914 = vmatpush.bf16.xpose.msra.mxu0 0
        %915 = vmatpush.bf16.xpose.msra.mxu0 0
        %916 = vmatpush.bf16.xpose.msra.mxu0 0
        %917 = vmatpush.bf16.xpose.msra.mxu0 0
        %918 = vmatpush.bf16.xpose.msra.mxu0 %v909
        %919 = vmatmul.bf16.gmra.mxu0 %v906
        %v920 = vpop.f32.mrf.mxu0
        %v921 = vadd.f32 0.0, %v920
        %v922 = vpop.f32.mrf.mxu0
        %923 = vdwg.mxu0
        %v924 = vsel %vm847, %v864, -inf
        %925 = vmax.xlane.f32.xlu0 %v924
        %v926 = vpop.xlane.xlu0 %925
        %v927 = vsel %vm847, %v883, -inf
        %928 = vmax.xlane.f32.xlu0 %v927
        %v929 = vpop.xlane.xlu0 %928
        %v930 = vsel %vm847, %v902, -inf
        %931 = vmax.xlane.f32.xlu0 %v930
        %v932 = vpop.xlane.xlu0 %931
        %v933 = vsel %vm847, %v921, -inf
        %934 = vmax.xlane.f32.xlu0 %v933
        %v935 = vpop.xlane.xlu0 %934
        %v936 = vsub.f32 %v864, %v926
        %v937 = vsub.f32 %v883, %v929
        %v938 = vsub.f32 %v902, %v932
        %v939 = vsub.f32 %v921, %v935
        %v940 = vmul.f32 %v936, 1.442695
        %v941 = vpow.pop %v940
        %v942 = vmul.f32 %v937, 1.442695
        %v943 = vpow.pop %v942
        %v944 = vmul.f32 %v938, 1.442695
        %v945 = vpow.pop %v944
        %v946 = vmul.f32 %v939, 1.442695
        %v947 = vpow.pop %v946
        %v948 = vsel %vm847, %v941, 0.0
        %949 = vadd.xlane.f32.xlu0 %v948
        %v950 = vpop.xlane.xlu0 %949
        %v951 = vsel %vm847, %v943, 0.0
        %952 = vadd.xlane.f32.xlu0 %v951
        %v953 = vpop.xlane.xlu0 %952
        %v954 = vsel %vm847, %v945, 0.0
        %955 = vadd.xlane.f32.xlu0 %v954
        %v956 = vpop.xlane.xlu0 %955
        %v957 = vsel %vm847, %v947, 0.0
        %958 = vadd.xlane.f32.xlu0 %v957
        %v959 = vpop.xlane.xlu0 %958
        %v960 = vrcp.pop %v950
        %v961 = vrcp.pop %v953
        %v962 = vrcp.pop %v956
        %v963 = vrcp.pop %v959
        %v964 = vmul.f32 %v941, %v960
        %v965 = vmul.f32 %v943, %v961
        %v966 = vmul.f32 %v945, %v962
        %v967 = vmul.f32 %v947, %v963
        %v968 = vpack.c.bf16 %v964, %v964
        %v969 = vpack.c.bf16 %v965, %v965
        %v970 = vpack.c.bf16 %v966, %v966
        %v971 = vpack.c.bf16 %v967, %v967
        %v973 = vsel %vm847, %v968, 0
        %vm975 = vcmask 1043456
        %v977 = vsel %vm975, %v843, 0
        %979 = vmatpush.bf16.msra.mxu0 0
        %980 = vmatpush.bf16.msra.mxu0 0
        %981 = vmatpush.bf16.msra.mxu0 0
        %982 = vmatpush.bf16.msra.mxu0 0
        %983 = vmatpush.bf16.msra.mxu0 0
        %984 = vmatpush.bf16.msra.mxu0 0
        %985 = vmatpush.bf16.msra.mxu0 0
        %986 = vmatpush.bf16.msra.mxu0 %v977
        %987 = vmatmul.bf16.gmra.mxu0 %v973
        %v988 = vpop.f32.mrf.mxu0
        %v989 = vadd.f32 0.0, %v988
        %v990 = vpop.f32.mrf.mxu0
        %991 = vdwg.mxu0
        %v993 = vsel %vm847, %v969, 0
        %v996 = vsel %vm975, %v844, 0
        %998 = vmatpush.bf16.msra.mxu0 0
        %999 = vmatpush.bf16.msra.mxu0 0
        %1000 = vmatpush.bf16.msra.mxu0 0
        %1001 = vmatpush.bf16.msra.mxu0 0
        %1002 = vmatpush.bf16.msra.mxu0 0
        %1003 = vmatpush.bf16.msra.mxu0 0
        %1004 = vmatpush.bf16.msra.mxu0 0
        %1005 = vmatpush.bf16.msra.mxu0 %v996
        %1006 = vmatmul.bf16.gmra.mxu0 %v993
        %v1007 = vpop.f32.mrf.mxu0
        %v1008 = vadd.f32 0.0, %v1007
        %v1009 = vpop.f32.mrf.mxu0
        %1010 = vdwg.mxu0
        %v1012 = vsel %vm847, %v970, 0
        %v1015 = vsel %vm975, %v845, 0
        %1017 = vmatpush.bf16.msra.mxu0 0
        %1018 = vmatpush.bf16.msra.mxu0 0
        %1019 = vmatpush.bf16.msra.mxu0 0
        %1020 = vmatpush.bf16.msra.mxu0 0
        %1021 = vmatpush.bf16.msra.mxu0 0
        %1022 = vmatpush.bf16.msra.mxu0 0
        %1023 = vmatpush.bf16.msra.mxu0 0
        %1024 = vmatpush.bf16.msra.mxu0 %v1015
        %1025 = vmatmul.bf16.gmra.mxu0 %v1012
        %v1026 = vpop.f32.mrf.mxu0
        %v1027 = vadd.f32 0.0, %v1026
        %v1028 = vpop.f32.mrf.mxu0
        %1029 = vdwg.mxu0
        %v1031 = vsel %vm847, %v971, 0
        %v1034 = vsel %vm975, %v846, 0
        %1036 = vmatpush.bf16.msra.mxu0 0
        %1037 = vmatpush.bf16.msra.mxu0 0
        %1038 = vmatpush.bf16.msra.mxu0 0
        %1039 = vmatpush.bf16.msra.mxu0 0
        %1040 = vmatpush.bf16.msra.mxu0 0
        %1041 = vmatpush.bf16.msra.mxu0 0
        %1042 = vmatpush.bf16.msra.mxu0 0
        %1043 = vmatpush.bf16.msra.mxu0 %v1034
        %1044 = vmatmul.bf16.gmra.mxu0 %v1031
        %v1045 = vpop.f32.mrf.mxu0
        %v1046 = vadd.f32 0.0, %v1045
        %v1047 = vpop.f32.mrf.mxu0
        %1048 = vdwg.mxu0
        %v1049 = vpack.c.bf16 %v989, %v989
        %v1050 = vld [vmem:[%s4] sm:$0xf]
        %v1051 = vpack.c.bf16 %v1008, %v1008
        %s1052 = scalar_lea.vmem %s4, 4
        %v1053 = vld [vmem:[%s1052] sm:$0xf]
        %v1055 = vsel %vm847, %v1051, 0
        %v1058 = vsel %vm975, %v1053, 0
        %1060 = vmatpush.bf16.msra.mxu0 0
        %1061 = vmatpush.bf16.msra.mxu0 0
        %1062 = vmatpush.bf16.msra.mxu0 0
        %1063 = vmatpush.bf16.msra.mxu0 0
        %1064 = vmatpush.bf16.msra.mxu0 0
        %1065 = vmatpush.bf16.msra.mxu0 0
        %1066 = vmatpush.bf16.msra.mxu0 0
        %1067 = vmatpush.bf16.msra.mxu0 %v1058
        %1068 = vmatmul.bf16.gmra.mxu0 %v1055
        %v1069 = vpop.f32.mrf.mxu0
        %v1070 = vadd.f32 0.0, %v1069
        %v1071 = vpop.f32.mrf.mxu0
        %1072 = vdwg.mxu0
        %v1074 = vsel %vm847, %v1049, 0
        %v1077 = vsel %vm975, %v1050, 0
        %1079 = vmatpush.bf16.msra.mxu0 0
        %1080 = vmatpush.bf16.msra.mxu0 0
        %1081 = vmatpush.bf16.msra.mxu0 0
        %1082 = vmatpush.bf16.msra.mxu0 0
        %1083 = vmatpush.bf16.msra.mxu0 0
        %1084 = vmatpush.bf16.msra.mxu0 0
        %1085 = vmatpush.bf16.msra.mxu0 0
        %1086 = vmatpush.bf16.msra.mxu0 %v1077
        %1087 = vmatmul.bf16.gmra.mxu0 %v1074
        %v1088 = vpop.f32.mrf.mxu0
        %v1089 = vadd.f32 %v1070, %v1088
        %v1090 = vpop.f32.mrf.mxu0
        %1091 = vdwg.mxu0
        %v1092 = vpack.c.bf16 %v1027, %v1027
        %s1093 = scalar_lea.vmem %s4, 8
        %v1094 = vld [vmem:[%s1093] sm:$0xf]
        %v1096 = vsel %vm847, %v1092, 0
        %v1099 = vsel %vm975, %v1094, 0
        %1101 = vmatpush.bf16.msra.mxu0 0
        %1102 = vmatpush.bf16.msra.mxu0 0
        %1103 = vmatpush.bf16.msra.mxu0 0
        %1104 = vmatpush.bf16.msra.mxu0 0
        %1105 = vmatpush.bf16.msra.mxu0 0
        %1106 = vmatpush.bf16.msra.mxu0 0
        %1107 = vmatpush.bf16.msra.mxu0 0
        %1108 = vmatpush.bf16.msra.mxu0 %v1099
        %1109 = vmatmul.bf16.gmra.mxu0 %v1096
        %v1110 = vpop.f32.mrf.mxu0
        %v1111 = vadd.f32 0.0, %v1110
        %v1112 = vpop.f32.mrf.mxu0
        %1113 = vdwg.mxu0
        %v1114 = vadd.f32 %v1089, %v1111
        %v1115 = vpack.c.bf16 %v1046, %v1046
        %s1116 = scalar_lea.vmem %s4, 12
        %v1117 = vld [vmem:[%s1116] sm:$0xf]
        %v1119 = vsel %vm847, %v1115, 0
        %v1122 = vsel %vm975, %v1117, 0
        %1124 = vmatpush.bf16.msra.mxu0 0
        %1125 = vmatpush.bf16.msra.mxu0 0
        %1126 = vmatpush.bf16.msra.mxu0 0
        %1127 = vmatpush.bf16.msra.mxu0 0
        %1128 = vmatpush.bf16.msra.mxu0 0
        %1129 = vmatpush.bf16.msra.mxu0 0
        %1130 = vmatpush.bf16.msra.mxu0 0
        %1131 = vmatpush.bf16.msra.mxu0 %v1122
        %1132 = vmatmul.bf16.gmra.mxu0 %v1119
        %v1133 = vpop.f32.mrf.mxu0
        %v1134 = vadd.f32 0.0, %v1133
        %v1135 = vpop.f32.mrf.mxu0
        %1136 = vdwg.mxu0
        %v1137 = vadd.f32 %v1114, %v1134
        %v1138 = vld [vmem:[%s5] sm:$0x1]
        %v1140 = vperm.slane %v1138, 0
        %v1142 = vadd.f32 %v1137, %v1140
        %v1143 = vperm.slane %v374, 2
        %v1144 = vmul.f32 %v1143, %v1142
        %v1145 = vadd.f32 %v373, %v1144
        %v1146 = vsel %vm376, %v1145, 0.0
        %1147 = vadd.xlane.f32.xlu0 %v1146
        %v1148 = vpop.xlane.xlu0 %1147
        %v1149 = vmul.f32 %v1148, %v386
        %v1150 = vsub.f32 %v1145, %v1149
        %v1151 = vmul.f32 %v1150, %v1150
        %v1152 = vsel %vm376, %v1151, 0.0
        %1153 = vadd.xlane.f32.xlu0 %v1152
        %v1154 = vpop.xlane.xlu0 %1153
        %v1155 = vmul.f32 %v1154, %v386
        %v1156 = vadd.f32 %v1155, 1e-06
        %v1157 = vrsqrt.pop %v1156
        %v1158 = vmul.f32 %v1157, %v1156
        %v1159 = vmul.f32 %v1158, %v1157
        %v1160 = vmul.f32 0.5, %v1159
        %v1161 = vsub.f32 1.5, %v1160
        %v1162 = vmul.f32 %v1157, %v1161
        %vm1163 = vweird.f32 %v1156
        %vm1164 = vweird.f32 %v1157
        %vm1165 = vmor %vm1163, %vm1164
        %v1166 = vsel %vm1165, %v1157, %v1162
        %v1167 = vmul.f32 %v1150, %v1166
        %v1168 = vperm.slane %v375, 4
        %v1169 = vmul.f32 %v1167, %v1168
        %v1170 = vperm.slane %v374, 3
        %v1171 = vadd.f32 %v1169, %v1170
        %v1172 = vpack.c.bf16 %v1171, %v1171
        %v1173 = vld [vmem:[%s6] sm:$0xf]
        %v1174 = vld [vmem:[%s6 + $0x4] sm:$0xf]
        %v1175 = vld [vmem:[%s6 + $0x8] sm:$0xf]
        %v1176 = vld [vmem:[%s6 + $0xc] sm:$0xf]
        %v1177 = vld [vmem:[%s7] sm:$0x1]
        %v1179 = vperm.slane %v1177, 0
        %v1185 = vunpack.c.l.b16 %v1173
        %v1186 = vunpack.c.l.b16 %v1174
        %v1187 = vunpack.c.l.b16 %v1175
        %v1188 = vunpack.c.l.b16 %v1176
        %v1189 = vpack.c.b16 %v1186, %v1185
        %v1190 = vpack.c.b16 %v1188, %v1187
        %v1194 = vsel %vm376, %v1172, 0
        %1196 = vmatpush.bf16.msra.mxu0 0
        %1197 = vmatpush.bf16.msra.mxu0 0
        %1198 = vmatpush.bf16.msra.mxu0 0
        %1199 = vmatpush.bf16.msra.mxu0 0
        %1200 = vmatpush.bf16.msra.mxu0 0
        %1201 = vmatpush.bf16.msra.mxu0 0
        %1202 = vmatpush.bf16.msra.mxu0 %v1190
        %1203 = vmatpush.bf16.msra.mxu0 %v1189
        %1204 = vmatmul.bf16.gmra.mxu0 %v1194
        %v1205 = vpop.f32.mrf.mxu0
        %v1206 = vadd.f32 %v1179, %v1205
        %v1207 = vpop.f32.mrf.mxu0
        %1208 = vdwg.mxu0
        %v1209 = vmul.f32 %v1206, 0.5
        %v1210 = vmul.f32 %v1206, 0.044715
        %v1211 = vmul.f32 %v1210, %v1206
        %v1212 = vmul.f32 %v1211, %v1206
        %v1213 = vadd.f32 %v1206, %v1212
        %v1214 = vmul.f32 %v1213, 0.7978846
        %v1215 = vtanh.pop %v1214
        %v1216 = vadd.f32 %v1215, 1.0
        %v1217 = vmul.f32 %v1209, %v1216
        %v1218 = vpack.c.bf16 %v1217, %v1217
        %v1219 = vld [vmem:[%s8] sm:$0xf]
        %v1220 = vld [vmem:[%s8 + $0x4] sm:$0xf]
        %v1221 = vld [vmem:[%s8 + $0x8] sm:$0xf]
        %v1222 = vld [vmem:[%s8 + $0xc] sm:$0xf]
        %v1223 = vld [vmem:[%s8 + $0x10] sm:$0xf]
        %v1224 = vld [vmem:[%s8 + $0x14] sm:$0xf]
        %v1225 = vld [vmem:[%s8 + $0x18] sm:$0xf]
        %v1226 = vld [vmem:[%s8 + $0x1c] sm:$0xf]
        %v1227 = vld [vmem:[%s8 + $0x20] sm:$0xf]
        %v1228 = vld [vmem:[%s8 + $0x24] sm:$0xf]
        %v1229 = vld [vmem:[%s8 + $0x28] sm:$0xf]
        %v1230 = vld [vmem:[%s8 + $0x2c] sm:$0xf]
        %v1231 = vld [vmem:[%s8 + $0x30] sm:$0xf]
        %v1232 = vld [vmem:[%s8 + $0x34] sm:$0xf]
        %v1233 = vld [vmem:[%s8 + $0x38] sm:$0xf]
        %v1234 = vld [vmem:[%s8 + $0x3c] sm:$0xf]
        %v1235 = vld [vmem:[%s9] sm:$0x1]
        %v1237 = vperm.slane %v1235, 0
        %v1255 = vunpack.c.l.b16 %v1219
        %v1256 = vunpack.c.l.b16 %v1220
        %v1257 = vunpack.c.l.b16 %v1221
        %v1258 = vunpack.c.l.b16 %v1222
        %v1259 = vunpack.c.l.b16 %v1223
        %v1260 = vunpack.c.l.b16 %v1224
        %v1261 = vunpack.c.l.b16 %v1225
        %v1262 = vunpack.c.l.b16 %v1226
        %v1263 = vunpack.c.l.b16 %v1227
        %v1264 = vunpack.c.l.b16 %v1228
        %v1265 = vunpack.c.l.b16 %v1229
        %v1266 = vunpack.c.l.b16 %v1230
        %v1267 = vunpack.c.l.b16 %v1231
        %v1268 = vunpack.c.l.b16 %v1232
        %v1269 = vunpack.c.l.b16 %v1233
        %v1270 = vunpack.c.l.b16 %v1234
        %v1271 = vpack.c.b16 %v1256, %v1255
        %v1272 = vpack.c.b16 %v1258, %v1257
        %v1273 = vpack.c.b16 %v1260, %v1259
        %v1274 = vpack.c.b16 %v1262, %v1261
        %v1275 = vpack.c.b16 %v1264, %v1263
        %v1276 = vpack.c.b16 %v1266, %v1265
        %v1277 = vpack.c.b16 %v1268, %v1267
        %v1278 = vpack.c.b16 %v1270, %v1269
        %1287 = vmatpush.bf16.msra.mxu0 %v1278
        %1288 = vmatpush.bf16.msra.mxu0 %v1277
        %1289 = vmatpush.bf16.msra.mxu0 %v1276
        %1290 = vmatpush.bf16.msra.mxu0 %v1275
        %1291 = vmatpush.bf16.msra.mxu0 %v1274
        %1292 = vmatpush.bf16.msra.mxu0 %v1273
        %1293 = vmatpush.bf16.msra.mxu0 %v1272
        %1294 = vmatpush.bf16.msra.mxu0 %v1271
        %1295 = vmatmul.bf16.gmra.mxu0 %v1218
        %v1296 = vpop.f32.mrf.mxu0
        %v1297 = vadd.f32 %v1237, %v1296
        %v1298 = vpop.f32.mrf.mxu0
        %1299 = vdwg.mxu0
        %v1300 = vperm.slane %v374, 5
        %v1301 = vmul.f32 %v1300, %v1297
        %v1302 = vadd.f32 %v1145, %v1301
        %1303 = vst.msk [vmem:[%s363] sm:$0xff] %vm376, %v1302
        %s1304 = sand.u32 %s252, 1
        %s1305 = scalar_lea.sflag [#allocation3], %s1304
        %s1306 = sand.u32 %s252, 1
        %s1307 = smul.addr %s1306, 8
        %s1308 = scalar_lea.vmem [#allocation2], %s1307
        // Predicated region
        $region61: #{tpu_custom_call.1} parent=59 // pred_check
          %p1309 = pneg %p262
        $region62: #{tpu_custom_call.1} parent=59 // pred_check_branch
          %1311 = sbr.rel (%p1309) target = $region64
        $region63: #{tpu_custom_call.1} parent=59 // pred_region
          %1313 = vsyncadd %s1305, 0
          %s1314 = smul.addr %s24, 8
          %s1315 = scalar_lea.hbm %s10, %s1314
          %s1317 = sshll.u32 %s1308, 4
          %s1318 = int_to_ptr.vmem [resolvable:$true] %s1317
          %s1319 = sshll.u32 %s1315, 4
          %s1320 = int_to_ptr.hbm [resolvable:$true] %s1319
          %1322 = dma.vmem_to_hbm [thread:$0]  %s1318, 128, %s1320, %s1305
        $region64: #{tpu_custom_call.1} parent=59 // pred_fallthru
          _
      $region60: #{tpu_custom_call.1} parent=5 // pred_fallthru
        _
      %p1323 = scmp.le.s32.totalorder 2, %s19
      // Predicated region
      $region65: #{tpu_custom_call.1} parent=5 // pred_check
        %p1324 = pneg %p1323
      $region66: #{tpu_custom_call.1} parent=5 // pred_check_branch
        %1326 = sbr.rel (%p1324) target = $region68
      $region67: #{tpu_custom_call.1} parent=5 // pred_region
        %s1327 = ssub.s32 %s19, 2
        // Predicated region
        $region69: #{tpu_custom_call.1} parent=67 // pred_check
          %p1328 = pneg %p268
        $region70: #{tpu_custom_call.1} parent=67 // pred_check_branch
          %1330 = sbr.rel (%p1328) target = $region72
        $region71: #{tpu_custom_call.1} parent=67 // pred_region
          %s1331 = sand.u32 %s253, 1
          %s1332 = scalar_lea.sflag [#allocation3], %s1331
          %s1333 = sand.u32 %s253, 1
          %s1334 = smul.addr %s1333, 8
          %s1335 = scalar_lea.vmem [#allocation2], %s1334
          %1337 = dma.done %s1332, 128
        $region72: #{tpu_custom_call.1} parent=67 // pred_fallthru
          _
      $region68: #{tpu_custom_call.1} parent=5 // pred_fallthru
        _
    $region6: #{tpu_custom_call.1} parent=1 // loop_footer
      %s23 = sadd.s32 1, %s19
    $region7: #{tpu_custom_call.1} parent=1 // loop_footer_branch
      %18 = sbr.rel target = $region3
    $region8: #{tpu_custom_call.1} parent=1 // loop_exit
      _
    %1338 = vsyncpa [#allocation3], 1
    %s1339 = scalar_lea.sflag [#allocation3], 1
    %1340 = vsyncpa %s1339, 1

</llo_original>
